<compile_context>
chip_gen: v7x
topology: tpu7x:2x2x1
jax: 0.10.0
libtpu: 0.0.40
codegen_flags: <defaults>
</compile_context>

<pallas_src>
import functools
import math

import jax
import jax.numpy as jnp
from jax.experimental import pallas as pl
from jax.experimental.pallas import tpu as pltpu

_BN_EPS = 1e-5
_VMEM_LIMIT_BYTES = 48 * 1024 * 1024     # < v7x 64 MiB physical, plenty for ~10 MiB tiles
_W_RESIDENT_BYTES = 8 * 1024 * 1024      # keep the whole (K, N) weight in VMEM below this


# ---------------------------------------------------------------------------
# Fused matmul + folded-BN + optional residual + optional ReLU.
#   out = relu?( (X @ W) * scale + bias [+ residual] )
# X / W / residual are bf16, accumulation + epilogue are f32, output is bf16.
# ---------------------------------------------------------------------------
def _mm_epilogue(acc, scale_ref, bias_ref, res_ref, apply_relu, out_dtype):
    y = acc * scale_ref[...] + bias_ref[...]
    if res_ref is not None:
        y = y + res_ref[...].astype(jnp.float32)
    if apply_relu:
        y = jnp.maximum(y, 0.0)
    return y.astype(out_dtype)


def _mm_kernel_single_k(x_ref, w_ref, scale_ref, bias_ref, *rest,
                        apply_relu, has_residual):
    # Whole K in one block: no accumulator scratch, dot feeds the epilogue.
    if has_residual:
        res_ref, o_ref = rest
    else:
        res_ref, (o_ref,) = None, rest
    acc = jnp.dot(x_ref[...], w_ref[...], preferred_element_type=jnp.float32)
    o_ref[...] = _mm_epilogue(acc, scale_ref, bias_ref, res_ref,
                              apply_relu, o_ref.dtype)


def _mm_kernel_multi_k(x_ref, w_ref, scale_ref, bias_ref, *rest,
                       apply_relu, has_residual):
    if has_residual:
        res_ref, o_ref, acc_ref = rest
    else:
        res_ref, (o_ref, acc_ref) = None, rest
    k = pl.program_id(1)
    part = jnp.dot(x_ref[...], w_ref[...], preferred_element_type=jnp.float32)

    @pl.when(k == 0)
    def _():
        acc_ref[...] = part          # write (no zero-init + read-modify-write)

    @pl.when(k > 0)
    def _():
        acc_ref[...] += part

    @pl.when(k == pl.num_programs(1) - 1)
    def _():
        o_ref[...] = _mm_epilogue(acc_ref[...], scale_ref, bias_ref, res_ref,
                                  apply_relu, o_ref.dtype)


def _pick_m_tile(m, cap=256):
    """Largest tile <= cap dividing m, preferring >=2 blocks (megacore/pipeline)."""
    candidates = (cap, 128, 64, 32, 16, 8)
    for t in candidates:
        if t <= m and m % t == 0 and m // t >= 2:
            return t
    for t in candidates:
        if t <= m and m % t == 0:
            return t
    return m      # small / odd M: full extent (always a legal block)


def _pick_k_tile(k):
    for t in (512, 256, 128):
        if k % t == 0:
            return t
    return k


def fused_matmul_bn(x, w, scale, bias, residual=None, relu=True):
    """relu?((x @ w) * scale + bias [+ residual]) as one pallas_call."""
    M, K = x.shape
    K2, N = w.shape
    assert K == K2, (x.shape, w.shape)
    has_residual = residual is not None
    tm = _pick_m_tile(M)
    scale2 = scale.reshape(1, N).astype(jnp.float32)
    bias2 = bias.reshape(1, N).astype(jnp.float32)
    out_shape = jax.ShapeDtypeStruct((M, N), x.dtype)

    if K * N * w.dtype.itemsize <= _W_RESIDENT_BYTES:
        # Weight fully resident (constant index_map -> fetched once), X streamed
        # exactly once, no accumulator scratch, epilogue fused with the dot.
        grid = (M // tm,)
        in_specs = [
            pl.BlockSpec((tm, K), lambda m: (m, 0)),
            pl.BlockSpec((K, N), lambda m: (0, 0)),
            pl.BlockSpec((1, N), lambda m: (0, 0)),
            pl.BlockSpec((1, N), lambda m: (0, 0)),
        ]
        args = [x, w, scale2, bias2]
        if has_residual:
            in_specs.append(pl.BlockSpec((tm, N), lambda m: (m, 0)))
            args.append(residual)
        kernel = functools.partial(_mm_kernel_single_k,
                                   apply_relu=relu, has_residual=has_residual)
        grid_spec = pltpu.PrefetchScalarGridSpec(
            num_scalar_prefetch=0, grid=grid, in_specs=in_specs,
            out_specs=pl.BlockSpec((tm, N), lambda m: (m, 0)),
            scratch_shapes=[])
        dims = ("parallel",)
    else:
        # General fallback: K tiled as the last ("arbitrary") grid axis.
        tk = _pick_k_tile(K)
        grid = (M // tm, K // tk)
        in_specs = [
            pl.BlockSpec((tm, tk), lambda m, k: (m, k)),
            pl.BlockSpec((tk, N), lambda m, k: (k, 0)),
            pl.BlockSpec((1, N), lambda m, k: (0, 0)),
            pl.BlockSpec((1, N), lambda m, k: (0, 0)),
        ]
        args = [x, w, scale2, bias2]
        if has_residual:
            in_specs.append(pl.BlockSpec((tm, N), lambda m, k: (m, 0)))
            args.append(residual)
        kernel = functools.partial(_mm_kernel_multi_k,
                                   apply_relu=relu, has_residual=has_residual)
        grid_spec = pltpu.PrefetchScalarGridSpec(
            num_scalar_prefetch=0, grid=grid, in_specs=in_specs,
            out_specs=pl.BlockSpec((tm, N), lambda m, k: (m, 0)),
            scratch_shapes=[pltpu.VMEM((tm, N), jnp.float32)])
        dims = ("parallel", "arbitrary")

    return pl.pallas_call(
        kernel,
        out_shape=out_shape,
        grid_spec=grid_spec,
        compiler_params=pltpu.CompilerParams(
            dimension_semantics=dims,
            vmem_limit_bytes=_VMEM_LIMIT_BYTES),
    )(*args)


# ---------------------------------------------------------------------------
# 3x3 conv (pad 1, stride 1 or 2) + folded BN + ReLU, 9-tap accumulation
# inside the kernel (no 9x im2col blob through HBM).
# ---------------------------------------------------------------------------
def _conv3x3_kernel(ph_ref, w_ref, scale_ref, bias_ref, o_ref, acc_ref, *,
                    stride, ho, wo):
    # ph_ref:  (1, P, Hp, Wp, Cin)  phase-split, zero-padded input (bf16)
    # w_ref:   (3, 3, Cin, Cout)    VMEM-resident weights (bf16)
    # o_ref:   (1, ho, wo, Cout)
    # acc_ref: (ho, wo, Cout)       f32 accumulator scratch
    s = stride
    first = True
    for dy in range(3):
        for dx in range(3):
            p = (dy % s) * s + (dx % s)
            oy, ox = dy // s, dx // s
            wtap = w_ref[dy, dx]                               # (Cin, Cout)
            for oh in range(ho):
                win = ph_ref[0, p, oy + oh, ox:ox + wo, :]     # (wo, Cin)
                part = jnp.dot(win, wtap,
                               preferred_element_type=jnp.float32)
                if first:
                    acc_ref[oh] = part
                else:
                    acc_ref[oh] += part
            first = False
    y = acc_ref[...] * scale_ref[...] + bias_ref[...]
    y = jnp.maximum(y, 0.0)
    o_ref[0] = y.astype(o_ref.dtype)


def conv3x3_bn_relu(x_nhwc, w4, scale, bias, *, stride):
    """relu(bn(conv3x3(x))) as one pallas_call over images / RoIs."""
    n, h, w, c = x_nhwc.shape
    cout = w4.shape[-1]
    s = stride
    ho = (h + 2 - 3) // s + 1
    wo = (w + 2 - 3) // s + 1
    xp = jnp.pad(x_nhwc, ((0, 0), (1, 1), (1, 1), (0, 0)))
    if s == 1:
        ph = xp[:, None]                                       # (n, 1, h+2, w+2, c)
    else:
        # Phase split: ph[b, py*s+px, i, j, :] = xp[b, i*s+py, j*s+px, :]
        # -> every (dy, dx) tap becomes a contiguous (ho, wo) window.
        hp2 = ((h + 2 + s - 1) // s) * s
        wp2 = ((w + 2 + s - 1) // s) * s
        xp = jnp.pad(xp, ((0, 0), (0, hp2 - (h + 2)), (0, wp2 - (w + 2)), (0, 0)))
        ph = xp.reshape(n, hp2 // s, s, wp2 // s, s, c)
        ph = ph.transpose(0, 2, 4, 1, 3, 5).reshape(n, s * s, hp2 // s, wp2 // s, c)
    _, P, Hp, Wp, _ = ph.shape

    kernel = functools.partial(_conv3x3_kernel, stride=s, ho=ho, wo=wo)
    out = pl.pallas_call(
        kernel,
        out_shape=jax.ShapeDtypeStruct((n, ho, wo, cout), x_nhwc.dtype),
        grid_spec=pltpu.PrefetchScalarGridSpec(
            num_scalar_prefetch=0,
            grid=(n,),
            in_specs=[
                pl.BlockSpec((1, P, Hp, Wp, c), lambda b: (b, 0, 0, 0, 0)),
                pl.BlockSpec(tuple(w4.shape), lambda b: (0, 0, 0, 0)),
                pl.BlockSpec((1, cout), lambda b: (0, 0)),
                pl.BlockSpec((1, cout), lambda b: (0, 0)),
            ],
            out_specs=pl.BlockSpec((1, ho, wo, cout), lambda b: (b, 0, 0, 0)),
            scratch_shapes=[pltpu.VMEM((ho, wo, cout), jnp.float32)],
        ),
        compiler_params=pltpu.CompilerParams(
            dimension_semantics=("parallel",),
            vmem_limit_bytes=_VMEM_LIMIT_BYTES),
    )(ph, w4,
      scale.reshape(1, cout).astype(jnp.float32),
      bias.reshape(1, cout).astype(jnp.float32))
    return out, ho, wo


# ---------------------------------------------------------------------------
# Parameters (match the PyTorch init: kaiming fan_out conv, BN weight=1/bias=0)
# ---------------------------------------------------------------------------
def _kaiming_conv(key, cout, cin, kh, kw):
    fan_out = cout * kh * kw
    std = math.sqrt(2.0 / fan_out)
    return std * jax.random.normal(key, (cout, cin, kh, kw), dtype=jnp.float32)


def _bn_init(c):
    # (gamma, beta, running_mean, running_var)
    return (jnp.ones((c,), jnp.float32), jnp.zeros((c,), jnp.float32),
            jnp.zeros((c,), jnp.float32), jnp.ones((c,), jnp.float32))


def init_res5_params(key, in_channels=1024, planes=512, num_blocks=3, stride=2):
    blocks = []
    cin = in_channels
    for b in range(num_blocks):
        s = stride if b == 0 else 1
        need_ds = (s != 1) or (cin != planes * 4)
        key, k1, k2, k3, kd = jax.random.split(key, 5)
        blocks.append({
            'stride': s,
            'w1': _kaiming_conv(k1, planes, cin, 1, 1), 'bn1': _bn_init(planes),
            'w2': _kaiming_conv(k2, planes, planes, 3, 3), 'bn2': _bn_init(planes),
            'w3': _kaiming_conv(k3, planes * 4, planes, 1, 1), 'bn3': _bn_init(planes * 4),
            'wd': _kaiming_conv(kd, planes * 4, cin, 1, 1) if need_ds else None,
            'bnd': _bn_init(planes * 4) if need_ds else None,
        })
        cin = planes * 4
    return blocks


def _fold_bn(bn, eps=_BN_EPS):
    gamma, beta, mean, var = bn
    scale = gamma / jnp.sqrt(var + eps)
    return scale, beta - mean * scale


def prepare_kernel_params(raw_blocks):
    """Fold BN and pre-pack bf16 weights in kernel-friendly layouts."""
    prepared = []
    for blk in raw_blocks:
        s1, b1 = _fold_bn(blk['bn1'])
        s2, b2 = _fold_bn(blk['bn2'])
        s3, b3 = _fold_bn(blk['bn3'])
        p = {
            'stride': blk['stride'],
            'w1': blk['w1'][:, :, 0, 0].T.astype(jnp.bfloat16),               # (Cin, planes)
            'w2': jnp.transpose(blk['w2'], (2, 3, 1, 0)).astype(jnp.bfloat16),  # (3,3,planes,planes)
            'w3': blk['w3'][:, :, 0, 0].T.astype(jnp.bfloat16),               # (planes, 4*planes)
            's1': s1, 'b1': b1, 's2': s2, 'b2': b2, 's3': s3, 'b3': b3,
            'wd': None,
        }
        if blk['wd'] is not None:
            sd, bd = _fold_bn(blk['bnd'])
            p['wd'] = blk['wd'][:, :, 0, 0].T.astype(jnp.bfloat16)            # (Cin, 4*planes)
            p['sd'], p['bd'] = sd, bd
        prepared.append(p)
    return prepared


# ---------------------------------------------------------------------------
# Forward pass (Pallas path)
# ---------------------------------------------------------------------------
def _bottleneck_forward(x, blk):
    # TODO(synk): for the tiny-spatial RoI regime, the whole block could be a
    # single pallas_call with h1/h2 resident in VMEM (perf item 7).
    n, h, w, cin = x.shape
    s = blk['stride']
    planes = blk['w1'].shape[1]
    cout = blk['w3'].shape[1]
    x_flat = x.reshape(n * h * w, cin)

    # conv1 (1x1) + bn1 + relu
    h1 = fused_matmul_bn(x_flat, blk['w1'], blk['s1'], blk['b1'], relu=True)

    # conv2 (3x3, stride s) + bn2 + relu -- 9-tap accumulation inside the kernel
    h2, ho, wo = conv3x3_bn_relu(h1.reshape(n, h, w, planes), blk['w2'],
                                 blk['s2'], blk['b2'], stride=s)
    h2_flat = h2.reshape(n * ho * wo, planes)

    # identity path (strided 1x1 conv + bn when downsampling)
    if blk['wd'] is not None:
        # TODO(synk): fold the stride-2 spatial subsample into the matmul
        # kernel's index_map instead of this wrapper gather (perf item 9).
        xd = x[:, ::s, ::s, :].reshape(n * ho * wo, cin)
        identity = fused_matmul_bn(xd, blk['wd'], blk['sd'], blk['bd'],
                                   relu=False)
    else:
        identity = x_flat

    # conv3 (1x1) + bn3 + residual add + final relu, fused in one kernel
    out = fused_matmul_bn(h2_flat, blk['w3'], blk['s3'], blk['b3'],
                          residual=identity, relu=True)
    return out.reshape(n, ho, wo, cout)


def res5_forward_nhwc(x_nhwc, kernel_blocks):
    x = x_nhwc.astype(jnp.bfloat16)
    for blk in kernel_blocks:
        x = _bottleneck_forward(x, blk)
    return x


def res5_forward(x_nchw, kernel_blocks):
    # TODO(synk): keep NHWC end-to-end when the surrounding graph allows it
    # (perf item 10); the boundary transposes only exist to match NCHW I/O.
    x = jnp.transpose(x_nchw, (0, 2, 3, 1))   # channels on lanes
    y = res5_forward_nhwc(x, kernel_blocks)
    return jnp.transpose(y, (0, 3, 1, 2))     # back to NCHW like PyTorch


# ---------------------------------------------------------------------------
# Pure-JAX reference (lax.conv) mirroring the kernels' bf16-in / f32-acc numerics
# ---------------------------------------------------------------------------
def _conv_ref(x, w, stride, padding):
    return jax.lax.conv_general_dilated(
        x, w, window_strides=(stride, stride), padding=padding,
        dimension_numbers=('NCHW', 'OIHW', 'NCHW'),
        precision=jax.lax.Precision.HIGHEST)


def _bn_ref(x, gamma, beta, mean, var, eps=_BN_EPS):
    inv = gamma / jnp.sqrt(var + eps)
    return x * inv[None, :, None, None] + (beta - mean * inv)[None, :, None, None]


def _q_bf16(a):
    return a.astype(jnp.bfloat16).astype(jnp.float32)


def res5_reference(x, raw_blocks):
    x = _q_bf16(x)
    for blk in raw_blocks:
        s = blk['stride']
        identity = x
        out = _q_bf16(jax.nn.relu(_bn_ref(
            _conv_ref(x, _q_bf16(blk['w1']), 1, 'VALID'), *blk['bn1'])))
        out = _q_bf16(jax.nn.relu(_bn_ref(
            _conv_ref(out, _q_bf16(blk['w2']), s, ((1, 1), (1, 1))), *blk['bn2'])))
        out = _bn_ref(_conv_ref(out, _q_bf16(blk['w3']), 1, 'VALID'), *blk['bn3'])
        if blk['wd'] is not None:
            identity = _q_bf16(_bn_ref(
                _conv_ref(x, _q_bf16(blk['wd']), s, 'VALID'), *blk['bnd']))
        x = _q_bf16(jax.nn.relu(out + identity))
    return x


if __name__ == "__main__":
    key = jax.random.PRNGKey(0)
    kx, kp = jax.random.split(key)

    # Small but structurally faithful input: Res_5 requires 1024 input channels.
    N, C, H, W = 2, 1024, 8, 8
    x = jax.random.normal(kx, (N, C, H, W), dtype=jnp.float32)

    raw_blocks = init_res5_params(kp)
    kernel_blocks = prepare_kernel_params(raw_blocks)

    out = res5_forward(x, kernel_blocks)
    out = jax.block_until_ready(out)

    assert out.shape == (N, 2048, H // 2, W // 2), out.shape

    ref = res5_reference(x, raw_blocks)
    out_f32 = out.astype(jnp.float32)
    max_err = float(jnp.max(jnp.abs(out_f32 - ref)))
    assert jnp.allclose(out_f32, ref, atol=5e-2, rtol=5e-2), max_err

    print("KERNEL_OK")
</pallas_src>

<mosaic_0001>
module attributes {stable_mosaic.version = 11 : i64} {
  func.func @_mm_kernel_single_k(%arg0: i32, %arg1: memref<64x1024xbf16, #tpu.memory_space<vmem>>, %arg2: memref<1024x512xbf16, #tpu.memory_space<vmem>>, %arg3: memref<1x512xf32, #tpu.memory_space<vmem>>, %arg4: memref<1x512xf32, #tpu.memory_space<vmem>>, %arg5: memref<64x512xbf16, #tpu.memory_space<vmem>>) attributes {dimension_semantics = [#tpu.dimension_semantics<parallel>], iteration_bounds = array<i64: 2>, scalar_prefetch = 0 : i64, scratch_operands = 0 : i64, tpu.core_type = #tpu.core_type<tc>, window_params = [{transform_indices = @transform_0, window_bounds = array<i64: 64, 1024>}, {pipeline_mode = #tpu.pipeline_mode<synchronous>, transform_indices = @transform_1, window_bounds = array<i64: 1024, 512>}, {pipeline_mode = #tpu.pipeline_mode<synchronous>, transform_indices = @transform_2, window_bounds = array<i64: 1, 512>}, {pipeline_mode = #tpu.pipeline_mode<synchronous>, transform_indices = @transform_3, window_bounds = array<i64: 1, 512>}, {transform_indices = @transform_4, window_bounds = array<i64: 64, 512>}]} {
    %c0 = arith.constant 0 : index
    %c0_0 = arith.constant 0 : index
    %0 = vector.load %arg1[%c0, %c0_0] : memref<64x1024xbf16, #tpu.memory_space<vmem>>, vector<64x1024xbf16>
    %c0_1 = arith.constant 0 : index
    %c0_2 = arith.constant 0 : index
    %1 = vector.load %arg2[%c0_1, %c0_2] : memref<1024x512xbf16, #tpu.memory_space<vmem>>, vector<1024x512xbf16>
    %cst = arith.constant dense<0.000000e+00> : vector<64x512xf32>
    %2 = tpu.matmul %0, %1, %cst {dimension_numbers = #tpu.dot_dimension_numbers<[1], [0], [0], [1], [0, 0, 1, 1], [], []>} : vector<64x1024xbf16>, vector<1024x512xbf16>, vector<64x512xf32> -> vector<64x512xf32>
    %c0_3 = arith.constant 0 : index
    %c0_4 = arith.constant 0 : index
    %3 = vector.load %arg3[%c0_3, %c0_4] : memref<1x512xf32, #tpu.memory_space<vmem>>, vector<1x512xf32>
    %4 = vector.broadcast %3 : vector<1x512xf32> to vector<64x512xf32>
    %5 = arith.mulf %2, %4 : vector<64x512xf32>
    %c0_5 = arith.constant 0 : index
    %c0_6 = arith.constant 0 : index
    %6 = vector.load %arg4[%c0_5, %c0_6] : memref<1x512xf32, #tpu.memory_space<vmem>>, vector<1x512xf32>
    %7 = vector.broadcast %6 : vector<1x512xf32> to vector<64x512xf32>
    %8 = arith.addf %5, %7 : vector<64x512xf32>
    %cst_7 = arith.constant 0.000000e+00 : f32
    %9 = vector.broadcast %cst_7 : f32 to vector<64x512xf32>
    %10 = arith.maximumf %8, %9 : vector<64x512xf32>
    %11 = arith.truncf %10 : vector<64x512xf32> to vector<64x512xbf16>
    %c0_8 = arith.constant 0 : index
    %c0_9 = arith.constant 0 : index
    %12 = vector.load %arg5[%c0_8, %c0_9] : memref<64x512xbf16, #tpu.memory_space<vmem>>, vector<64x512xbf16>
    tpu.vector_store %arg5[%c0_8, %c0_9], %11 {strides = array<i32>} : memref<64x512xbf16, #tpu.memory_space<vmem>>, vector<64x512xbf16>,
    return
  }
  func.func @transform_0(%arg0: i32) -> (i32, i32) {
    %c0_i32 = arith.constant 0 : i32
    %c0_i32_0 = arith.constant 0 : i32
    return %arg0, %c0_i32 : i32, i32
  }
  func.func @transform_1(%arg0: i32) -> (i32, i32) {
    %c0_i32 = arith.constant 0 : i32
    %c0_i32_0 = arith.constant 0 : i32
    %c0_i32_1 = arith.constant 0 : i32
    return %c0_i32, %c0_i32_0 : i32, i32
  }
  func.func @transform_2(%arg0: i32) -> (i32, i32) {
    %c0_i32 = arith.constant 0 : i32
    %c0_i32_0 = arith.constant 0 : i32
    %c0_i32_1 = arith.constant 0 : i32
    return %c0_i32, %c0_i32_0 : i32, i32
  }
  func.func @transform_3(%arg0: i32) -> (i32, i32) {
    %c0_i32 = arith.constant 0 : i32
    %c0_i32_0 = arith.constant 0 : i32
    %c0_i32_1 = arith.constant 0 : i32
    return %c0_i32, %c0_i32_0 : i32, i32
  }
  func.func @transform_4(%arg0: i32) -> (i32, i32) {
    %c0_i32 = arith.constant 0 : i32
    %c0_i32_0 = arith.constant 0 : i32
    return %arg0, %c0_i32 : i32, i32
  }
}

</mosaic_0001>

<llo_original>
// kernel: tpu_custom_call.1
$region0: #{tpu_custom_call.1}
  #allocation0 [shape = 'u32[]', space=smem, size = 0x4, offset = 0x4, fixed_abs, tag = 'smem constant byte address 0x4 - core index']
  #allocation1 [shape = 'u32[144,128]{1,0:T(1,128)}', space=vmem, size = 0x12000, scoped, tag = 'internal scratch']
  %s0 = inlined_call_operand.hbm [shape: bf16[128,1024], index: 0, kind: input, shape index: {}]
  %s1 = inlined_call_operand.hbm [shape: bf16[1024,512], index: 1, kind: input, shape index: {}]
  %s2 = inlined_call_operand.vmem [shape: f32[1,512], index: 2, kind: input, shape index: {}]
  %s3 = inlined_call_operand.vmem [shape: f32[1,512], index: 3, kind: input, shape index: {}]
  %s4 = inlined_call_operand.hbm [shape: bf16[128,512], index: 4, kind: output, shape index: {}]
  %s5 = sld [smem:[#allocation0]]
  $region57: #{tpu_custom_call.1} parent=0
    _
  %s7 = ssub.s32 1, %s5
  %s8 = scalar_select 0, %s7, %s5
  $region1: #{tpu_custom_call.1} parent=0
    #allocation2 [shape = 'u8[262144]{0}', space=vmem, size = 0x40000, scoped, tag = 'input window, operand 0']
    #allocation3 [shape = 's32[2]{0}', space=sflag, size = 0x8, scoped, tag = 'scoped memory for tpu_custom_call.1']
    #allocation4 [shape = 's32[2]{0}', space=sflag, size = 0x8, scoped, tag = 'scoped memory for tpu_custom_call.1']
    #allocation5 [shape = 'u8[1048576]{0}', space=vmem, size = 0x100000, scoped, tag = 'input window, operand 1, single buffered']
    #allocation6 [shape = 's32[1]{0}', space=sflag, size = 0x4, scoped, tag = 'scoped memory for tpu_custom_call.1']
    #allocation7 [shape = 'u8[131072]{0}', space=vmem, size = 0x20000, scoped, tag = 'output window, operand 0']
    %9 = vsyncpa [#allocation3], 0
    %s10 = scalar_lea.sflag [#allocation3], 1
    %11 = vsyncpa %s10, 0
    %12 = vsyncpa [#allocation6], 0
    %13 = vsyncpa [#allocation4], 0
    %s14 = scalar_lea.sflag [#allocation4], 1
    %15 = vsyncpa %s14, 0
    loop: start=0, step=1, limit=4
    $region2: #{tpu_custom_call.1} parent=1 // loop_pre_header
      _
    $region3: #{tpu_custom_call.1} parent=1 // loop_header
      %s17 = sphi 0, %s21
      %p18 = scmp.ge.s32.totalorder %s17, 4
      %s27 = sphi 0, %s29
      %s30 = sphi 0, %s27
      %s31 = sphi 0, %s30
      %s47 = sphi 0, %s31
      %s51 = sphi 0, %s51
      %s53 = sphi 0, %s51
      %s54 = sphi 0, %s53
      %s68 = sphi 0, %s54
      %s72 = sphi 0, %s72
      %s74 = sphi 0, %s72
      %s75 = sphi 0, %s74
      %s89 = sphi 0, %s75
      %s93 = sphi 0, %s93
      %s95 = sphi 0, %s93
      %s96 = sphi 0, %s95
      %s110 = sphi 0, %s96
      %s116 = sphi 0, %s118
      %s119 = sphi 0, %s116
      %s120 = sphi 0, %s119
      %s136 = sphi 0, %s120
    $region4: #{tpu_custom_call.1} parent=1 // loop_header_branch
      %20 = sbr.rel (%p18) target = $region8
    $region5: #{tpu_custom_call.1} parent=1 // loop_body
      %s22 = ssub.s32 %s17, 1
      %s23 = ssub.s32 %s17, 2
      %s24 = sadd.s32 %s17, 1
      %s25 = ssub.s32 %s17, %s24
      %p26 = scmp.eq.s32.totalorder %s25, 0
      %s28 = sadd.s32 %s27, 1
      %s29 = scalar_select %p26, %s27, %s28
      %p32 = pneg %p26
      %p33 = scmp.eq.s32.totalorder %s17, 1
      %p34 = por %p32, %p33
      %p35 = scmp.ne.s32.totalorder %s27, %s30
      %p36 = scmp.eq.s32.totalorder %s17, 0
      %p37 = por %p35, %p36
      %p38 = scmp.ne.s32.totalorder %s27, %s30
      %p39 = scmp.eq.s32.totalorder %s22, 1
      %p40 = por %p38, %p39
      %p41 = scmp.ne.s32.totalorder %s30, %s31
      %p42 = scmp.eq.s32.totalorder %s22, 0
      %p43 = por %p41, %p42
      %p44 = scmp.ne.s32.totalorder %s30, %s31
      %p45 = scmp.eq.s32.totalorder %s23, 1
      %p46 = por %p44, %p45
      %p48 = scmp.ne.s32.totalorder %s31, %s47
      %p49 = scmp.eq.s32.totalorder %s23, 0
      %p50 = por %p48, %p49
      %s52 = sadd.s32 %s51, 1
      %p55 = scmp.eq.s32.totalorder %s17, 1
      %p56 = scmp.ne.s32.totalorder %s51, %s53
      %p57 = scmp.eq.s32.totalorder %s17, 0
      %p58 = por %p56, %p57
      %p59 = scmp.ne.s32.totalorder %s51, %s53
      %p60 = scmp.eq.s32.totalorder %s22, 1
      %p61 = por %p59, %p60
      %p62 = scmp.ne.s32.totalorder %s53, %s54
      %p63 = scmp.eq.s32.totalorder %s22, 0
      %p64 = por %p62, %p63
      %p65 = scmp.ne.s32.totalorder %s53, %s54
      %p66 = scmp.eq.s32.totalorder %s23, 1
      %p67 = por %p65, %p66
      %p69 = scmp.ne.s32.totalorder %s54, %s68
      %p70 = scmp.eq.s32.totalorder %s23, 0
      %p71 = por %p69, %p70
      %s73 = sadd.s32 %s72, 1
      %p76 = scmp.eq.s32.totalorder %s17, 1
      %p77 = scmp.ne.s32.totalorder %s72, %s74
      %p78 = scmp.eq.s32.totalorder %s17, 0
      %p79 = por %p77, %p78
      %p80 = scmp.ne.s32.totalorder %s72, %s74
      %p81 = scmp.eq.s32.totalorder %s22, 1
      %p82 = por %p80, %p81
      %p83 = scmp.ne.s32.totalorder %s74, %s75
      %p84 = scmp.eq.s32.totalorder %s22, 0
      %p85 = por %p83, %p84
      %p86 = scmp.ne.s32.totalorder %s74, %s75
      %p87 = scmp.eq.s32.totalorder %s23, 1
      %p88 = por %p86, %p87
      %p90 = scmp.ne.s32.totalorder %s75, %s89
      %p91 = scmp.eq.s32.totalorder %s23, 0
      %p92 = por %p90, %p91
      %s94 = sadd.s32 %s93, 1
      %p97 = scmp.eq.s32.totalorder %s17, 1
      %p98 = scmp.ne.s32.totalorder %s93, %s95
      %p99 = scmp.eq.s32.totalorder %s17, 0
      %p100 = por %p98, %p99
      %p101 = scmp.ne.s32.totalorder %s93, %s95
      %p102 = scmp.eq.s32.totalorder %s22, 1
      %p103 = por %p101, %p102
      %p104 = scmp.ne.s32.totalorder %s95, %s96
      %p105 = scmp.eq.s32.totalorder %s22, 0
      %p106 = por %p104, %p105
      %p107 = scmp.ne.s32.totalorder %s95, %s96
      %p108 = scmp.eq.s32.totalorder %s23, 1
      %p109 = por %p107, %p108
      %p111 = scmp.ne.s32.totalorder %s96, %s110
      %p112 = scmp.eq.s32.totalorder %s23, 0
      %p113 = por %p111, %p112
      %s114 = ssub.s32 %s17, %s24
      %p115 = scmp.eq.s32.totalorder %s114, 0
      %s117 = sadd.s32 %s116, 1
      %s118 = scalar_select %p115, %s116, %s117
      %p121 = pneg %p115
      %p122 = scmp.eq.s32.totalorder %s17, 1
      %p123 = por %p121, %p122
      %p124 = scmp.ne.s32.totalorder %s116, %s119
      %p125 = scmp.eq.s32.totalorder %s17, 0
      %p126 = por %p124, %p125
      %p127 = scmp.ne.s32.totalorder %s116, %s119
      %p128 = scmp.eq.s32.totalorder %s22, 1
      %p129 = por %p127, %p128
      %p130 = scmp.ne.s32.totalorder %s119, %s120
      %p131 = scmp.eq.s32.totalorder %s22, 0
      %p132 = por %p130, %p131
      %p133 = scmp.ne.s32.totalorder %s119, %s120
      %p134 = scmp.eq.s32.totalorder %s23, 1
      %p135 = por %p133, %p134
      %p137 = scmp.ne.s32.totalorder %s120, %s136
      %p138 = scmp.eq.s32.totalorder %s23, 0
      %p139 = por %p137, %p138
      %p140 = scmp.le.s32.totalorder 1, %s17
      %p141 = scmp.lt.s32.totalorder %s17, 3
      %p142 = pnand %p140, %p141
      %p143 = pneg %p142
      // Predicated region
      $region9: #{tpu_custom_call.1} parent=5 // pred_check
        _
      $region10: #{tpu_custom_call.1} parent=5 // pred_check_branch
        %145 = sbr.rel (%p142) target = $region12
      $region11: #{tpu_custom_call.1} parent=5 // pred_region
        %s146 = ssub.s32 %s17, 1
        // Predicated region
        $region13: #{tpu_custom_call.1} parent=11 // pred_check
          %p147 = pneg %p64
        $region14: #{tpu_custom_call.1} parent=11 // pred_check_branch
          %149 = sbr.rel (%p147) target = $region16
        $region15: #{tpu_custom_call.1} parent=11 // pred_region
          %s151 = ssub.s32 32768, 32768
          %152 = vsyncadd [#allocation6], %s151
          %s153 = sshll.u32 [#allocation5], 4
          %s154 = int_to_ptr.vmem [resolvable:$true] %s153
          %159 = dma.hbm_to_vmem [thread:$0]  %s1, 32768, %s154, [#allocation6], 256, 256, 16
        $region16: #{tpu_custom_call.1} parent=11 // pred_fallthru
          _
        // Predicated region
        $region17: #{tpu_custom_call.1} parent=11 // pred_check
          %p160 = pneg %p85
        $region18: #{tpu_custom_call.1} parent=11 // pred_check_branch
          %162 = sbr.rel (%p160) target = $region20
        $region19: #{tpu_custom_call.1} parent=11 // pred_region
          _
        $region20: #{tpu_custom_call.1} parent=11 // pred_fallthru
          _
        // Predicated region
        $region21: #{tpu_custom_call.1} parent=11 // pred_check
          %p163 = pneg %p106
        $region22: #{tpu_custom_call.1} parent=11 // pred_check_branch
          %165 = sbr.rel (%p163) target = $region24
        $region23: #{tpu_custom_call.1} parent=11 // pred_region
          _
        $region24: #{tpu_custom_call.1} parent=11 // pred_fallthru
          _
      $region12: #{tpu_custom_call.1} parent=5 // pred_fallthru
        _
      %p166 = scmp.lt.s32.totalorder %s17, 2
      // Predicated region
      $region25: #{tpu_custom_call.1} parent=5 // pred_check
        %p167 = pneg %p166
      $region26: #{tpu_custom_call.1} parent=5 // pred_check_branch
        %169 = sbr.rel (%p167) target = $region28
      $region27: #{tpu_custom_call.1} parent=5 // pred_region
        // Predicated region
        $region29: #{tpu_custom_call.1} parent=27 // pred_check
          %p170 = pneg %p37
        $region30: #{tpu_custom_call.1} parent=27 // pred_check_branch
          %172 = sbr.rel (%p170) target = $region32
        $region31: #{tpu_custom_call.1} parent=27 // pred_region
          %s173 = sand.u32 %s27, 1
          %s174 = scalar_lea.sflag [#allocation3], %s173
          %s175 = sand.u32 %s27, 1
          %s176 = smul.addr %s175, 256
          %s177 = scalar_lea.vmem [#allocation2], %s176
          %s178 = smul.u32 8, %s17
          %s180 = ssub.s32 4096, 4096
          %181 = vsyncadd %s174, %s180
          %s182 = smul.addr %s178, 8
          %s183 = smul.addr %s182, 64
          %s184 = scalar_lea.hbm %s0, %s183
          %s185 = sshll.u32 %s177, 4
          %s186 = int_to_ptr.vmem [resolvable:$true] %s185
          %191 = dma.hbm_to_vmem [thread:$0]  %s184, 4096, %s186, %s174, 512, 512, 32
        $region32: #{tpu_custom_call.1} parent=27 // pred_fallthru
          _
      $region28: #{tpu_custom_call.1} parent=5 // pred_fallthru
        _
      %p192 = scmp.le.s32.totalorder 1, %s17
      %p193 = scmp.lt.s32.totalorder %s17, 3
      %p194 = pnand %p192, %p193
      %p195 = pneg %p194
      // Predicated region
      $region33: #{tpu_custom_call.1} parent=5 // pred_check
        _
      $region34: #{tpu_custom_call.1} parent=5 // pred_check_branch
        %197 = sbr.rel (%p194) target = $region36
      $region35: #{tpu_custom_call.1} parent=5 // pred_region
        %s198 = ssub.s32 %s17, 1
        %s199 = sand.u32 %s30, 1
        %s200 = scalar_lea.sflag [#allocation3], %s199
        %s201 = sand.u32 %s30, 1
        %s202 = smul.addr %s201, 256
        %s203 = scalar_lea.vmem [#allocation2], %s202
        // Predicated region
        $region37: #{tpu_custom_call.1} parent=35 // pred_check
          %p204 = pneg %p43
        $region38: #{tpu_custom_call.1} parent=35 // pred_check_branch
          %206 = sbr.rel (%p204) target = $region40
        $region39: #{tpu_custom_call.1} parent=35 // pred_region
          %207 = dma.done %s200, 4096
        $region40: #{tpu_custom_call.1} parent=35 // pred_fallthru
          _
        // Predicated region
        $region41: #{tpu_custom_call.1} parent=35 // pred_check
          %p208 = pneg %p64
        $region42: #{tpu_custom_call.1} parent=35 // pred_check_branch
          %210 = sbr.rel (%p208) target = $region44
        $region43: #{tpu_custom_call.1} parent=35 // pred_region
          %211 = dma.done [#allocation6], 32768
        $region44: #{tpu_custom_call.1} parent=35 // pred_fallthru
          _
        %s212 = sand.u32 %s30, 1
        %s213 = scalar_lea.sflag [#allocation3], %s212
        %s214 = sand.u32 %s30, 1
        %s215 = smul.addr %s214, 256
        %s216 = scalar_lea.vmem [#allocation2], %s215
        %p217 = pneg %p43
        %p218 = pneg %p40
        %p219 = pneg %p64
        %p220 = pneg %p61
        %p221 = pneg %p85
        %p222 = pneg %p82
        %p223 = pneg %p106
        %p224 = pneg %p103
        %p225 = pneg %p132
        %p226 = pneg %p129
        %s227 = sand.u32 %s119, 1
        %s228 = scalar_lea.sflag [#allocation4], %s227
        %s229 = sand.u32 %s119, 1
        %s230 = smul.addr %s229, 128
        %s231 = scalar_lea.vmem [#allocation7], %s230
        %s232 = smul.u32 8, %s22
        %s233 = smul.u32 8, %s22
        %v234 = vld [vmem:[%s203] sm:$0xff]
        %v235 = vld [vmem:[%s203 + $0x8] sm:$0xff]
        %v236 = vld [vmem:[%s203 + $0x10] sm:$0xff]
        %v237 = vld [vmem:[%s203 + $0x18] sm:$0xff]
        %v238 = vld [vmem:[%s203 + $0x20] sm:$0xff]
        %v239 = vld [vmem:[%s203 + $0x28] sm:$0xff]
        %v240 = vld [vmem:[%s203 + $0x30] sm:$0xff]
        %v241 = vld [vmem:[%s203 + $0x38] sm:$0xff]
        %v242 = vld [vmem:[%s203 + $0x40] sm:$0xff]
        %v243 = vld [vmem:[%s203 + $0x48] sm:$0xff]
        %v244 = vld [vmem:[%s203 + $0x50] sm:$0xff]
        %v245 = vld [vmem:[%s203 + $0x58] sm:$0xff]
        %v246 = vld [vmem:[%s203 + $0x60] sm:$0xff]
        %v247 = vld [vmem:[%s203 + $0x68] sm:$0xff]
        %v248 = vld [vmem:[%s203 + $0x70] sm:$0xff]
        %v249 = vld [vmem:[%s203 + $0x78] sm:$0xff]
        %v250 = vld [vmem:[%s203 + $0x80] sm:$0xff]
        %v251 = vld [vmem:[%s203 + $0x88] sm:$0xff]
        %v252 = vld [vmem:[%s203 + $0x90] sm:$0xff]
        %v253 = vld [vmem:[%s203 + $0x98] sm:$0xff]
        %v254 = vld [vmem:[%s203 + $0xa0] sm:$0xff]
        %v255 = vld [vmem:[%s203 + $0xa8] sm:$0xff]
        %v256 = vld [vmem:[%s203 + $0xb0] sm:$0xff]
        %v257 = vld [vmem:[%s203 + $0xb8] sm:$0xff]
        %v258 = vld [vmem:[%s203 + $0xc0] sm:$0xff]
        %v259 = vld [vmem:[%s203 + $0xc8] sm:$0xff]
        %v260 = vld [vmem:[%s203 + $0xd0] sm:$0xff]
        %v261 = vld [vmem:[%s203 + $0xd8] sm:$0xff]
        %v262 = vld [vmem:[%s203 + $0xe0] sm:$0xff]
        %v263 = vld [vmem:[%s203 + $0xe8] sm:$0xff]
        %v264 = vld [vmem:[%s203 + $0xf0] sm:$0xff]
        %v265 = vld [vmem:[%s203 + $0xf8] sm:$0xff]
        %v266 = vld [vmem:[#allocation5] sm:$0xff]
        %v267 = vld [vmem:[#allocation5 + $0x8] sm:$0xff]
        %v268 = vld [vmem:[#allocation5 + $0x10] sm:$0xff]
        %v269 = vld [vmem:[#allocation5 + $0x18] sm:$0xff]
        %v270 = vld [vmem:[#allocation5 + $0x20] sm:$0xff]
        %v271 = vld [vmem:[#allocation5 + $0x28] sm:$0xff]
        %v272 = vld [vmem:[#allocation5 + $0x30] sm:$0xff]
        %v273 = vld [vmem:[#allocation5 + $0x38] sm:$0xff]
        %v274 = vld [vmem:[#allocation5 + $0x40] sm:$0xff]
        %v275 = vld [vmem:[#allocation5 + $0x48] sm:$0xff]
        %v276 = vld [vmem:[#allocation5 + $0x50] sm:$0xff]
        %v277 = vld [vmem:[#allocation5 + $0x58] sm:$0xff]
        %v278 = vld [vmem:[#allocation5 + $0x60] sm:$0xff]
        %v279 = vld [vmem:[#allocation5 + $0x68] sm:$0xff]
        %v280 = vld [vmem:[#allocation5 + $0x70] sm:$0xff]
        %v281 = vld [vmem:[#allocation5 + $0x78] sm:$0xff]
        %v282 = vld [vmem:[#allocation5 + $0x80] sm:$0xff]
        %v283 = vld [vmem:[#allocation5 + $0x88] sm:$0xff]
        %v284 = vld [vmem:[#allocation5 + $0x90] sm:$0xff]
        %v285 = vld [vmem:[#allocation5 + $0x98] sm:$0xff]
        %v286 = vld [vmem:[#allocation5 + $0xa0] sm:$0xff]
        %v287 = vld [vmem:[#allocation5 + $0xa8] sm:$0xff]
        %v288 = vld [vmem:[#allocation5 + $0xb0] sm:$0xff]
        %v289 = vld [vmem:[#allocation5 + $0xb8] sm:$0xff]
        %v290 = vld [vmem:[#allocation5 + $0xc0] sm:$0xff]
        %v291 = vld [vmem:[#allocation5 + $0xc8] sm:$0xff]
        %v292 = vld [vmem:[#allocation5 + $0xd0] sm:$0xff]
        %v293 = vld [vmem:[#allocation5 + $0xd8] sm:$0xff]
        %v294 = vld [vmem:[#allocation5 + $0xe0] sm:$0xff]
        %v295 = vld [vmem:[#allocation5 + $0xe8] sm:$0xff]
        %v296 = vld [vmem:[#allocation5 + $0xf0] sm:$0xff]
        %v297 = vld [vmem:[#allocation5 + $0xf8] sm:$0xff]
        %v298 = vld [vmem:[#allocation5 + $0x100] sm:$0xff]
        %v299 = vld [vmem:[#allocation5 + $0x108] sm:$0xff]
        %v300 = vld [vmem:[#allocation5 + $0x110] sm:$0xff]
        %v301 = vld [vmem:[#allocation5 + $0x118] sm:$0xff]
        %v302 = vld [vmem:[#allocation5 + $0x120] sm:$0xff]
        %v303 = vld [vmem:[#allocation5 + $0x128] sm:$0xff]
        %v304 = vld [vmem:[#allocation5 + $0x130] sm:$0xff]
        %v305 = vld [vmem:[#allocation5 + $0x138] sm:$0xff]
        %v306 = vld [vmem:[#allocation5 + $0x140] sm:$0xff]
        %v307 = vld [vmem:[#allocation5 + $0x148] sm:$0xff]
        %v308 = vld [vmem:[#allocation5 + $0x150] sm:$0xff]
        %v309 = vld [vmem:[#allocation5 + $0x158] sm:$0xff]
        %v310 = vld [vmem:[#allocation5 + $0x160] sm:$0xff]
        %v311 = vld [vmem:[#allocation5 + $0x168] sm:$0xff]
        %v312 = vld [vmem:[#allocation5 + $0x170] sm:$0xff]
        %v313 = vld [vmem:[#allocation5 + $0x178] sm:$0xff]
        %v314 = vld [vmem:[#allocation5 + $0x180] sm:$0xff]
        %v315 = vld [vmem:[#allocation5 + $0x188] sm:$0xff]
        %v316 = vld [vmem:[#allocation5 + $0x190] sm:$0xff]
        %v317 = vld [vmem:[#allocation5 + $0x198] sm:$0xff]
        %v318 = vld [vmem:[#allocation5 + $0x1a0] sm:$0xff]
        %v319 = vld [vmem:[#allocation5 + $0x1a8] sm:$0xff]
        %v320 = vld [vmem:[#allocation5 + $0x1b0] sm:$0xff]
        %v321 = vld [vmem:[#allocation5 + $0x1b8] sm:$0xff]
        %v322 = vld [vmem:[#allocation5 + $0x1c0] sm:$0xff]
        %v323 = vld [vmem:[#allocation5 + $0x1c8] sm:$0xff]
        %v324 = vld [vmem:[#allocation5 + $0x1d0] sm:$0xff]
        %v325 = vld [vmem:[#allocation5 + $0x1d8] sm:$0xff]
        %v326 = vld [vmem:[#allocation5 + $0x1e0] sm:$0xff]
        %v327 = vld [vmem:[#allocation5 + $0x1e8] sm:$0xff]
        %v328 = vld [vmem:[#allocation5 + $0x1f0] sm:$0xff]
        %v329 = vld [vmem:[#allocation5 + $0x1f8] sm:$0xff]
        %v330 = vld [vmem:[#allocation5 + $0x200] sm:$0xff]
        %v331 = vld [vmem:[#allocation5 + $0x208] sm:$0xff]
        %v332 = vld [vmem:[#allocation5 + $0x210] sm:$0xff]
        %v333 = vld [vmem:[#allocation5 + $0x218] sm:$0xff]
        %v334 = vld [vmem:[#allocation5 + $0x220] sm:$0xff]
        %v335 = vld [vmem:[#allocation5 + $0x228] sm:$0xff]
        %v336 = vld [vmem:[#allocation5 + $0x230] sm:$0xff]
        %v337 = vld [vmem:[#allocation5 + $0x238] sm:$0xff]
        %v338 = vld [vmem:[#allocation5 + $0x240] sm:$0xff]
        %v339 = vld [vmem:[#allocation5 + $0x248] sm:$0xff]
        %v340 = vld [vmem:[#allocation5 + $0x250] sm:$0xff]
        %v341 = vld [vmem:[#allocation5 + $0x258] sm:$0xff]
        %v342 = vld [vmem:[#allocation5 + $0x260] sm:$0xff]
        %v343 = vld [vmem:[#allocation5 + $0x268] sm:$0xff]
        %v344 = vld [vmem:[#allocation5 + $0x270] sm:$0xff]
        %v345 = vld [vmem:[#allocation5 + $0x278] sm:$0xff]
        %v346 = vld [vmem:[#allocation5 + $0x280] sm:$0xff]
        %v347 = vld [vmem:[#allocation5 + $0x288] sm:$0xff]
        %v348 = vld [vmem:[#allocation5 + $0x290] sm:$0xff]
        %v349 = vld [vmem:[#allocation5 + $0x298] sm:$0xff]
        %v350 = vld [vmem:[#allocation5 + $0x2a0] sm:$0xff]
        %v351 = vld [vmem:[#allocation5 + $0x2a8] sm:$0xff]
        %v352 = vld [vmem:[#allocation5 + $0x2b0] sm:$0xff]
        %v353 = vld [vmem:[#allocation5 + $0x2b8] sm:$0xff]
        %v354 = vld [vmem:[#allocation5 + $0x2c0] sm:$0xff]
        %v355 = vld [vmem:[#allocation5 + $0x2c8] sm:$0xff]
        %v356 = vld [vmem:[#allocation5 + $0x2d0] sm:$0xff]
        %v357 = vld [vmem:[#allocation5 + $0x2d8] sm:$0xff]
        %v358 = vld [vmem:[#allocation5 + $0x2e0] sm:$0xff]
        %v359 = vld [vmem:[#allocation5 + $0x2e8] sm:$0xff]
        %v360 = vld [vmem:[#allocation5 + $0x2f0] sm:$0xff]
        %v361 = vld [vmem:[#allocation5 + $0x2f8] sm:$0xff]
        %v362 = vld [vmem:[#allocation5 + $0x300] sm:$0xff]
        %v363 = vld [vmem:[#allocation5 + $0x308] sm:$0xff]
        %v364 = vld [vmem:[#allocation5 + $0x310] sm:$0xff]
        %v365 = vld [vmem:[#allocation5 + $0x318] sm:$0xff]
        %v366 = vld [vmem:[#allocation5 + $0x320] sm:$0xff]
        %v367 = vld [vmem:[#allocation5 + $0x328] sm:$0xff]
        %v368 = vld [vmem:[#allocation5 + $0x330] sm:$0xff]
        %v369 = vld [vmem:[#allocation5 + $0x338] sm:$0xff]
        %v370 = vld [vmem:[#allocation5 + $0x340] sm:$0xff]
        %v371 = vld [vmem:[#allocation5 + $0x348] sm:$0xff]
        %v372 = vld [vmem:[#allocation5 + $0x350] sm:$0xff]
        %v373 = vld [vmem:[#allocation5 + $0x358] sm:$0xff]
        %v374 = vld [vmem:[#allocation5 + $0x360] sm:$0xff]
        %v375 = vld [vmem:[#allocation5 + $0x368] sm:$0xff]
        %v376 = vld [vmem:[#allocation5 + $0x370] sm:$0xff]
        %v377 = vld [vmem:[#allocation5 + $0x378] sm:$0xff]
        %v378 = vld [vmem:[#allocation5 + $0x380] sm:$0xff]
        %v379 = vld [vmem:[#allocation5 + $0x388] sm:$0xff]
        %v380 = vld [vmem:[#allocation5 + $0x390] sm:$0xff]
        %v381 = vld [vmem:[#allocation5 + $0x398] sm:$0xff]
        %v382 = vld [vmem:[#allocation5 + $0x3a0] sm:$0xff]
        %v383 = vld [vmem:[#allocation5 + $0x3a8] sm:$0xff]
        %v384 = vld [vmem:[#allocation5 + $0x3b0] sm:$0xff]
        %v385 = vld [vmem:[#allocation5 + $0x3b8] sm:$0xff]
        %v386 = vld [vmem:[#allocation5 + $0x3c0] sm:$0xff]
        %v387 = vld [vmem:[#allocation5 + $0x3c8] sm:$0xff]
        %v388 = vld [vmem:[#allocation5 + $0x3d0] sm:$0xff]
        %v389 = vld [vmem:[#allocation5 + $0x3d8] sm:$0xff]
        %v390 = vld [vmem:[#allocation5 + $0x3e0] sm:$0xff]
        %v391 = vld [vmem:[#allocation5 + $0x3e8] sm:$0xff]
        %v392 = vld [vmem:[#allocation5 + $0x3f0] sm:$0xff]
        %v393 = vld [vmem:[#allocation5 + $0x3f8] sm:$0xff]
        %v394 = vld [vmem:[#allocation5 + $0x400] sm:$0xff]
        %v395 = vld [vmem:[#allocation5 + $0x408] sm:$0xff]
        %v396 = vld [vmem:[#allocation5 + $0x410] sm:$0xff]
        %v397 = vld [vmem:[#allocation5 + $0x418] sm:$0xff]
        %v398 = vld [vmem:[#allocation5 + $0x420] sm:$0xff]
        %v399 = vld [vmem:[#allocation5 + $0x428] sm:$0xff]
        %v400 = vld [vmem:[#allocation5 + $0x430] sm:$0xff]
        %v401 = vld [vmem:[#allocation5 + $0x438] sm:$0xff]
        %v402 = vld [vmem:[#allocation5 + $0x440] sm:$0xff]
        %v403 = vld [vmem:[#allocation5 + $0x448] sm:$0xff]
        %v404 = vld [vmem:[#allocation5 + $0x450] sm:$0xff]
        %v405 = vld [vmem:[#allocation5 + $0x458] sm:$0xff]
        %v406 = vld [vmem:[#allocation5 + $0x460] sm:$0xff]
        %v407 = vld [vmem:[#allocation5 + $0x468] sm:$0xff]
        %v408 = vld [vmem:[#allocation5 + $0x470] sm:$0xff]
        %v409 = vld [vmem:[#allocation5 + $0x478] sm:$0xff]
        %v410 = vld [vmem:[#allocation5 + $0x480] sm:$0xff]
        %v411 = vld [vmem:[#allocation5 + $0x488] sm:$0xff]
        %v412 = vld [vmem:[#allocation5 + $0x490] sm:$0xff]
        %v413 = vld [vmem:[#allocation5 + $0x498] sm:$0xff]
        %v414 = vld [vmem:[#allocation5 + $0x4a0] sm:$0xff]
        %v415 = vld [vmem:[#allocation5 + $0x4a8] sm:$0xff]
        %v416 = vld [vmem:[#allocation5 + $0x4b0] sm:$0xff]
        %v417 = vld [vmem:[#allocation5 + $0x4b8] sm:$0xff]
        %v418 = vld [vmem:[#allocation5 + $0x4c0] sm:$0xff]
        %v419 = vld [vmem:[#allocation5 + $0x4c8] sm:$0xff]
        %v420 = vld [vmem:[#allocation5 + $0x4d0] sm:$0xff]
        %v421 = vld [vmem:[#allocation5 + $0x4d8] sm:$0xff]
        %v422 = vld [vmem:[#allocation5 + $0x4e0] sm:$0xff]
        %v423 = vld [vmem:[#allocation5 + $0x4e8] sm:$0xff]
        %v424 = vld [vmem:[#allocation5 + $0x4f0] sm:$0xff]
        %v425 = vld [vmem:[#allocation5 + $0x4f8] sm:$0xff]
        %v426 = vld [vmem:[#allocation5 + $0x500] sm:$0xff]
        %v427 = vld [vmem:[#allocation5 + $0x508] sm:$0xff]
        %v428 = vld [vmem:[#allocation5 + $0x510] sm:$0xff]
        %v429 = vld [vmem:[#allocation5 + $0x518] sm:$0xff]
        %v430 = vld [vmem:[#allocation5 + $0x520] sm:$0xff]
        %v431 = vld [vmem:[#allocation5 + $0x528] sm:$0xff]
        %v432 = vld [vmem:[#allocation5 + $0x530] sm:$0xff]
        %v433 = vld [vmem:[#allocation5 + $0x538] sm:$0xff]
        %v434 = vld [vmem:[#allocation5 + $0x540] sm:$0xff]
        %v435 = vld [vmem:[#allocation5 + $0x548] sm:$0xff]
        %v436 = vld [vmem:[#allocation5 + $0x550] sm:$0xff]
        %v437 = vld [vmem:[#allocation5 + $0x558] sm:$0xff]
        %v438 = vld [vmem:[#allocation5 + $0x560] sm:$0xff]
        %v439 = vld [vmem:[#allocation5 + $0x568] sm:$0xff]
        %v440 = vld [vmem:[#allocation5 + $0x570] sm:$0xff]
        %v441 = vld [vmem:[#allocation5 + $0x578] sm:$0xff]
        %v442 = vld [vmem:[#allocation5 + $0x580] sm:$0xff]
        %v443 = vld [vmem:[#allocation5 + $0x588] sm:$0xff]
        %v444 = vld [vmem:[#allocation5 + $0x590] sm:$0xff]
        %v445 = vld [vmem:[#allocation5 + $0x598] sm:$0xff]
        %v446 = vld [vmem:[#allocation5 + $0x5a0] sm:$0xff]
        %v447 = vld [vmem:[#allocation5 + $0x5a8] sm:$0xff]
        %v448 = vld [vmem:[#allocation5 + $0x5b0] sm:$0xff]
        %v449 = vld [vmem:[#allocation5 + $0x5b8] sm:$0xff]
        %v450 = vld [vmem:[#allocation5 + $0x5c0] sm:$0xff]
        %v451 = vld [vmem:[#allocation5 + $0x5c8] sm:$0xff]
        %v452 = vld [vmem:[#allocation5 + $0x5d0] sm:$0xff]
        %v453 = vld [vmem:[#allocation5 + $0x5d8] sm:$0xff]
        %v454 = vld [vmem:[#allocation5 + $0x5e0] sm:$0xff]
        %v455 = vld [vmem:[#allocation5 + $0x5e8] sm:$0xff]
        %v456 = vld [vmem:[#allocation5 + $0x5f0] sm:$0xff]
        %v457 = vld [vmem:[#allocation5 + $0x5f8] sm:$0xff]
        %v458 = vld [vmem:[#allocation5 + $0x600] sm:$0xff]
        %v459 = vld [vmem:[#allocation5 + $0x608] sm:$0xff]
        %v460 = vld [vmem:[#allocation5 + $0x610] sm:$0xff]
        %v461 = vld [vmem:[#allocation5 + $0x618] sm:$0xff]
        %v462 = vld [vmem:[#allocation5 + $0x620] sm:$0xff]
        %v463 = vld [vmem:[#allocation5 + $0x628] sm:$0xff]
        %v464 = vld [vmem:[#allocation5 + $0x630] sm:$0xff]
        %v465 = vld [vmem:[#allocation5 + $0x638] sm:$0xff]
        %v466 = vld [vmem:[#allocation5 + $0x640] sm:$0xff]
        %v467 = vld [vmem:[#allocation5 + $0x648] sm:$0xff]
        %v468 = vld [vmem:[#allocation5 + $0x650] sm:$0xff]
        %v469 = vld [vmem:[#allocation5 + $0x658] sm:$0xff]
        %v470 = vld [vmem:[#allocation5 + $0x660] sm:$0xff]
        %v471 = vld [vmem:[#allocation5 + $0x668] sm:$0xff]
        %v472 = vld [vmem:[#allocation5 + $0x670] sm:$0xff]
        %v473 = vld [vmem:[#allocation5 + $0x678] sm:$0xff]
        %v474 = vld [vmem:[#allocation5 + $0x680] sm:$0xff]
        %v475 = vld [vmem:[#allocation5 + $0x688] sm:$0xff]
        %v476 = vld [vmem:[#allocation5 + $0x690] sm:$0xff]
        %v477 = vld [vmem:[#allocation5 + $0x698] sm:$0xff]
        %v478 = vld [vmem:[#allocation5 + $0x6a0] sm:$0xff]
        %v479 = vld [vmem:[#allocation5 + $0x6a8] sm:$0xff]
        %v480 = vld [vmem:[#allocation5 + $0x6b0] sm:$0xff]
        %v481 = vld [vmem:[#allocation5 + $0x6b8] sm:$0xff]
        %v482 = vld [vmem:[#allocation5 + $0x6c0] sm:$0xff]
        %v483 = vld [vmem:[#allocation5 + $0x6c8] sm:$0xff]
        %v484 = vld [vmem:[#allocation5 + $0x6d0] sm:$0xff]
        %v485 = vld [vmem:[#allocation5 + $0x6d8] sm:$0xff]
        %v486 = vld [vmem:[#allocation5 + $0x6e0] sm:$0xff]
        %v487 = vld [vmem:[#allocation5 + $0x6e8] sm:$0xff]
        %v488 = vld [vmem:[#allocation5 + $0x6f0] sm:$0xff]
        %v489 = vld [vmem:[#allocation5 + $0x6f8] sm:$0xff]
        %v490 = vld [vmem:[#allocation5 + $0x700] sm:$0xff]
        %v491 = vld [vmem:[#allocation5 + $0x708] sm:$0xff]
        %v492 = vld [vmem:[#allocation5 + $0x710] sm:$0xff]
        %v493 = vld [vmem:[#allocation5 + $0x718] sm:$0xff]
        %v494 = vld [vmem:[#allocation5 + $0x720] sm:$0xff]
        %v495 = vld [vmem:[#allocation5 + $0x728] sm:$0xff]
        %v496 = vld [vmem:[#allocation5 + $0x730] sm:$0xff]
        %v497 = vld [vmem:[#allocation5 + $0x738] sm:$0xff]
        %v498 = vld [vmem:[#allocation5 + $0x740] sm:$0xff]
        %v499 = vld [vmem:[#allocation5 + $0x748] sm:$0xff]
        %v500 = vld [vmem:[#allocation5 + $0x750] sm:$0xff]
        %v501 = vld [vmem:[#allocation5 + $0x758] sm:$0xff]
        %v502 = vld [vmem:[#allocation5 + $0x760] sm:$0xff]
        %v503 = vld [vmem:[#allocation5 + $0x768] sm:$0xff]
        %v504 = vld [vmem:[#allocation5 + $0x770] sm:$0xff]
        %v505 = vld [vmem:[#allocation5 + $0x778] sm:$0xff]
        %v506 = vld [vmem:[#allocation5 + $0x780] sm:$0xff]
        %v507 = vld [vmem:[#allocation5 + $0x788] sm:$0xff]
        %v508 = vld [vmem:[#allocation5 + $0x790] sm:$0xff]
        %v509 = vld [vmem:[#allocation5 + $0x798] sm:$0xff]
        %v510 = vld [vmem:[#allocation5 + $0x7a0] sm:$0xff]
        %v511 = vld [vmem:[#allocation5 + $0x7a8] sm:$0xff]
        %v512 = vld [vmem:[#allocation5 + $0x7b0] sm:$0xff]
        %v513 = vld [vmem:[#allocation5 + $0x7b8] sm:$0xff]
        %v514 = vld [vmem:[#allocation5 + $0x7c0] sm:$0xff]
        %v515 = vld [vmem:[#allocation5 + $0x7c8] sm:$0xff]
        %v516 = vld [vmem:[#allocation5 + $0x7d0] sm:$0xff]
        %v517 = vld [vmem:[#allocation5 + $0x7d8] sm:$0xff]
        %v518 = vld [vmem:[#allocation5 + $0x7e0] sm:$0xff]
        %v519 = vld [vmem:[#allocation5 + $0x7e8] sm:$0xff]
        %v520 = vld [vmem:[#allocation5 + $0x7f0] sm:$0xff]
        %v521 = vld [vmem:[#allocation5 + $0x7f8] sm:$0xff]
        %v554 = vunpack.c.l.b16 %v234
        %v555 = vunpack.c.h.b16 %v234
        %v556 = vunpack.c.l.b16 %v235
        %v557 = vunpack.c.h.b16 %v235
        %v558 = vunpack.c.l.b16 %v236
        %v559 = vunpack.c.h.b16 %v236
        %v560 = vunpack.c.l.b16 %v237
        %v561 = vunpack.c.h.b16 %v237
        %v562 = vunpack.c.l.b16 %v238
        %v563 = vunpack.c.h.b16 %v238
        %v564 = vunpack.c.l.b16 %v239
        %v565 = vunpack.c.h.b16 %v239
        %v566 = vunpack.c.l.b16 %v240
        %v567 = vunpack.c.h.b16 %v240
        %v568 = vunpack.c.l.b16 %v241
        %v569 = vunpack.c.h.b16 %v241
        %v570 = vunpack.c.l.b16 %v242
        %v571 = vunpack.c.h.b16 %v242
        %v572 = vunpack.c.l.b16 %v243
        %v573 = vunpack.c.h.b16 %v243
        %v574 = vunpack.c.l.b16 %v244
        %v575 = vunpack.c.h.b16 %v244
        %v576 = vunpack.c.l.b16 %v245
        %v577 = vunpack.c.h.b16 %v245
        %v578 = vunpack.c.l.b16 %v246
        %v579 = vunpack.c.h.b16 %v246
        %v580 = vunpack.c.l.b16 %v247
        %v581 = vunpack.c.h.b16 %v247
        %v582 = vunpack.c.l.b16 %v248
        %v583 = vunpack.c.h.b16 %v248
        %v584 = vunpack.c.l.b16 %v249
        %v585 = vunpack.c.h.b16 %v249
        %v586 = vunpack.c.l.b16 %v250
        %v587 = vunpack.c.h.b16 %v250
        %v588 = vunpack.c.l.b16 %v251
        %v589 = vunpack.c.h.b16 %v251
        %v590 = vunpack.c.l.b16 %v252
        %v591 = vunpack.c.h.b16 %v252
        %v592 = vunpack.c.l.b16 %v253
        %v593 = vunpack.c.h.b16 %v253
        %v594 = vunpack.c.l.b16 %v254
        %v595 = vunpack.c.h.b16 %v254
        %v596 = vunpack.c.l.b16 %v255
        %v597 = vunpack.c.h.b16 %v255
        %v598 = vunpack.c.l.b16 %v256
        %v599 = vunpack.c.h.b16 %v256
        %v600 = vunpack.c.l.b16 %v257
        %v601 = vunpack.c.h.b16 %v257
        %v602 = vunpack.c.l.b16 %v258
        %v603 = vunpack.c.h.b16 %v258
        %v604 = vunpack.c.l.b16 %v259
        %v605 = vunpack.c.h.b16 %v259
        %v606 = vunpack.c.l.b16 %v260
        %v607 = vunpack.c.h.b16 %v260
        %v608 = vunpack.c.l.b16 %v261
        %v609 = vunpack.c.h.b16 %v261
        %v610 = vunpack.c.l.b16 %v262
        %v611 = vunpack.c.h.b16 %v262
        %v612 = vunpack.c.l.b16 %v263
        %v613 = vunpack.c.h.b16 %v263
        %v614 = vunpack.c.l.b16 %v264
        %v615 = vunpack.c.h.b16 %v264
        %v616 = vunpack.c.l.b16 %v265
        %v617 = vunpack.c.h.b16 %v265
        %v618 = vpack.c.b16 %v562, %v554
        %v619 = vpack.c.b16 %v563, %v555
        %v620 = vpack.c.b16 %v564, %v556
        %v621 = vpack.c.b16 %v565, %v557
        %v622 = vpack.c.b16 %v566, %v558
        %v623 = vpack.c.b16 %v567, %v559
        %v624 = vpack.c.b16 %v568, %v560
        %v625 = vpack.c.b16 %v569, %v561
        %v626 = vpack.c.b16 %v578, %v570
        %v627 = vpack.c.b16 %v579, %v571
        %v628 = vpack.c.b16 %v580, %v572
        %v629 = vpack.c.b16 %v581, %v573
        %v630 = vpack.c.b16 %v582, %v574
        %v631 = vpack.c.b16 %v583, %v575
        %v632 = vpack.c.b16 %v584, %v576
        %v633 = vpack.c.b16 %v585, %v577
        %v634 = vpack.c.b16 %v594, %v586
        %v635 = vpack.c.b16 %v595, %v587
        %v636 = vpack.c.b16 %v596, %v588
        %v637 = vpack.c.b16 %v597, %v589
        %v638 = vpack.c.b16 %v598, %v590
        %v639 = vpack.c.b16 %v599, %v591
        %v640 = vpack.c.b16 %v600, %v592
        %v641 = vpack.c.b16 %v601, %v593
        %v642 = vpack.c.b16 %v610, %v602
        %v643 = vpack.c.b16 %v611, %v603
        %v644 = vpack.c.b16 %v612, %v604
        %v645 = vpack.c.b16 %v613, %v605
        %v646 = vpack.c.b16 %v614, %v606
        %v647 = vpack.c.b16 %v615, %v607
        %v648 = vpack.c.b16 %v616, %v608
        %v649 = vpack.c.b16 %v617, %v609
        %v938 = vunpack.c.l.b16 %v266
        %v939 = vunpack.c.h.b16 %v266
        %v940 = vunpack.c.l.b16 %v267
        %v941 = vunpack.c.h.b16 %v267
        %v942 = vunpack.c.l.b16 %v268
        %v943 = vunpack.c.h.b16 %v268
        %v944 = vunpack.c.l.b16 %v269
        %v945 = vunpack.c.h.b16 %v269
        %v946 = vunpack.c.l.b16 %v270
        %v947 = vunpack.c.h.b16 %v270
        %v948 = vunpack.c.l.b16 %v271
        %v949 = vunpack.c.h.b16 %v271
        %v950 = vunpack.c.l.b16 %v272
        %v951 = vunpack.c.h.b16 %v272
        %v952 = vunpack.c.l.b16 %v273
        %v953 = vunpack.c.h.b16 %v273
        %v954 = vunpack.c.l.b16 %v274
        %v955 = vunpack.c.h.b16 %v274
        %v956 = vunpack.c.l.b16 %v275
        %v957 = vunpack.c.h.b16 %v275
        %v958 = vunpack.c.l.b16 %v276
        %v959 = vunpack.c.h.b16 %v276
        %v960 = vunpack.c.l.b16 %v277
        %v961 = vunpack.c.h.b16 %v277
        %v962 = vunpack.c.l.b16 %v278
        %v963 = vunpack.c.h.b16 %v278
        %v964 = vunpack.c.l.b16 %v279
        %v965 = vunpack.c.h.b16 %v279
        %v966 = vunpack.c.l.b16 %v280
        %v967 = vunpack.c.h.b16 %v280
        %v968 = vunpack.c.l.b16 %v281
        %v969 = vunpack.c.h.b16 %v281
        %v970 = vunpack.c.l.b16 %v282
        %v971 = vunpack.c.h.b16 %v282
        %v972 = vunpack.c.l.b16 %v283
        %v973 = vunpack.c.h.b16 %v283
        %v974 = vunpack.c.l.b16 %v284
        %v975 = vunpack.c.h.b16 %v284
        %v976 = vunpack.c.l.b16 %v285
        %v977 = vunpack.c.h.b16 %v285
        %v978 = vunpack.c.l.b16 %v286
        %v979 = vunpack.c.h.b16 %v286
        %v980 = vunpack.c.l.b16 %v287
        %v981 = vunpack.c.h.b16 %v287
        %v982 = vunpack.c.l.b16 %v288
        %v983 = vunpack.c.h.b16 %v288
        %v984 = vunpack.c.l.b16 %v289
        %v985 = vunpack.c.h.b16 %v289
        %v986 = vunpack.c.l.b16 %v290
        %v987 = vunpack.c.h.b16 %v290
        %v988 = vunpack.c.l.b16 %v291
        %v989 = vunpack.c.h.b16 %v291
        %v990 = vunpack.c.l.b16 %v292
        %v991 = vunpack.c.h.b16 %v292
        %v992 = vunpack.c.l.b16 %v293
        %v993 = vunpack.c.h.b16 %v293
        %v994 = vunpack.c.l.b16 %v294
        %v995 = vunpack.c.h.b16 %v294
        %v996 = vunpack.c.l.b16 %v295
        %v997 = vunpack.c.h.b16 %v295
        %v998 = vunpack.c.l.b16 %v296
        %v999 = vunpack.c.h.b16 %v296
        %v1000 = vunpack.c.l.b16 %v297
        %v1001 = vunpack.c.h.b16 %v297
        %v1002 = vunpack.c.l.b16 %v298
        %v1003 = vunpack.c.h.b16 %v298
        %v1004 = vunpack.c.l.b16 %v299
        %v1005 = vunpack.c.h.b16 %v299
        %v1006 = vunpack.c.l.b16 %v300
        %v1007 = vunpack.c.h.b16 %v300
        %v1008 = vunpack.c.l.b16 %v301
        %v1009 = vunpack.c.h.b16 %v301
        %v1010 = vunpack.c.l.b16 %v302
        %v1011 = vunpack.c.h.b16 %v302
        %v1012 = vunpack.c.l.b16 %v303
        %v1013 = vunpack.c.h.b16 %v303
        %v1014 = vunpack.c.l.b16 %v304
        %v1015 = vunpack.c.h.b16 %v304
        %v1016 = vunpack.c.l.b16 %v305
        %v1017 = vunpack.c.h.b16 %v305
        %v1018 = vunpack.c.l.b16 %v306
        %v1019 = vunpack.c.h.b16 %v306
        %v1020 = vunpack.c.l.b16 %v307
        %v1021 = vunpack.c.h.b16 %v307
        %v1022 = vunpack.c.l.b16 %v308
        %v1023 = vunpack.c.h.b16 %v308
        %v1024 = vunpack.c.l.b16 %v309
        %v1025 = vunpack.c.h.b16 %v309
        %v1026 = vunpack.c.l.b16 %v310
        %v1027 = vunpack.c.h.b16 %v310
        %v1028 = vunpack.c.l.b16 %v311
        %v1029 = vunpack.c.h.b16 %v311
        %v1030 = vunpack.c.l.b16 %v312
        %v1031 = vunpack.c.h.b16 %v312
        %v1032 = vunpack.c.l.b16 %v313
        %v1033 = vunpack.c.h.b16 %v313
        %v1034 = vunpack.c.l.b16 %v314
        %v1035 = vunpack.c.h.b16 %v314
        %v1036 = vunpack.c.l.b16 %v315
        %v1037 = vunpack.c.h.b16 %v315
        %v1038 = vunpack.c.l.b16 %v316
        %v1039 = vunpack.c.h.b16 %v316
        %v1040 = vunpack.c.l.b16 %v317
        %v1041 = vunpack.c.h.b16 %v317
        %v1042 = vunpack.c.l.b16 %v318
        %v1043 = vunpack.c.h.b16 %v318
        %v1044 = vunpack.c.l.b16 %v319
        %v1045 = vunpack.c.h.b16 %v319
        %v1046 = vunpack.c.l.b16 %v320
        %v1047 = vunpack.c.h.b16 %v320
        %v1048 = vunpack.c.l.b16 %v321
        %v1049 = vunpack.c.h.b16 %v321
        %v1050 = vunpack.c.l.b16 %v322
        %v1051 = vunpack.c.h.b16 %v322
        %v1052 = vunpack.c.l.b16 %v323
        %v1053 = vunpack.c.h.b16 %v323
        %v1054 = vunpack.c.l.b16 %v324
        %v1055 = vunpack.c.h.b16 %v324
        %v1056 = vunpack.c.l.b16 %v325
        %v1057 = vunpack.c.h.b16 %v325
        %v1058 = vunpack.c.l.b16 %v326
        %v1059 = vunpack.c.h.b16 %v326
        %v1060 = vunpack.c.l.b16 %v327
        %v1061 = vunpack.c.h.b16 %v327
        %v1062 = vunpack.c.l.b16 %v328
        %v1063 = vunpack.c.h.b16 %v328
        %v1064 = vunpack.c.l.b16 %v329
        %v1065 = vunpack.c.h.b16 %v329
        %v1066 = vunpack.c.l.b16 %v330
        %v1067 = vunpack.c.h.b16 %v330
        %v1068 = vunpack.c.l.b16 %v331
        %v1069 = vunpack.c.h.b16 %v331
        %v1070 = vunpack.c.l.b16 %v332
        %v1071 = vunpack.c.h.b16 %v332
        %v1072 = vunpack.c.l.b16 %v333
        %v1073 = vunpack.c.h.b16 %v333
        %v1074 = vunpack.c.l.b16 %v334
        %v1075 = vunpack.c.h.b16 %v334
        %v1076 = vunpack.c.l.b16 %v335
        %v1077 = vunpack.c.h.b16 %v335
        %v1078 = vunpack.c.l.b16 %v336
        %v1079 = vunpack.c.h.b16 %v336
        %v1080 = vunpack.c.l.b16 %v337
        %v1081 = vunpack.c.h.b16 %v337
        %v1082 = vunpack.c.l.b16 %v338
        %v1083 = vunpack.c.h.b16 %v338
        %v1084 = vunpack.c.l.b16 %v339
        %v1085 = vunpack.c.h.b16 %v339
        %v1086 = vunpack.c.l.b16 %v340
        %v1087 = vunpack.c.h.b16 %v340
        %v1088 = vunpack.c.l.b16 %v341
        %v1089 = vunpack.c.h.b16 %v341
        %v1090 = vunpack.c.l.b16 %v342
        %v1091 = vunpack.c.h.b16 %v342
        %v1092 = vunpack.c.l.b16 %v343
        %v1093 = vunpack.c.h.b16 %v343
        %v1094 = vunpack.c.l.b16 %v344
        %v1095 = vunpack.c.h.b16 %v344
        %v1096 = vunpack.c.l.b16 %v345
        %v1097 = vunpack.c.h.b16 %v345
        %v1098 = vunpack.c.l.b16 %v346
        %v1099 = vunpack.c.h.b16 %v346
        %v1100 = vunpack.c.l.b16 %v347
        %v1101 = vunpack.c.h.b16 %v347
        %v1102 = vunpack.c.l.b16 %v348
        %v1103 = vunpack.c.h.b16 %v348
        %v1104 = vunpack.c.l.b16 %v349
        %v1105 = vunpack.c.h.b16 %v349
        %v1106 = vunpack.c.l.b16 %v350
        %v1107 = vunpack.c.h.b16 %v350
        %v1108 = vunpack.c.l.b16 %v351
        %v1109 = vunpack.c.h.b16 %v351
        %v1110 = vunpack.c.l.b16 %v352
        %v1111 = vunpack.c.h.b16 %v352
        %v1112 = vunpack.c.l.b16 %v353
        %v1113 = vunpack.c.h.b16 %v353
        %v1114 = vunpack.c.l.b16 %v354
        %v1115 = vunpack.c.h.b16 %v354
        %v1116 = vunpack.c.l.b16 %v355
        %v1117 = vunpack.c.h.b16 %v355
        %v1118 = vunpack.c.l.b16 %v356
        %v1119 = vunpack.c.h.b16 %v356
        %v1120 = vunpack.c.l.b16 %v357
        %v1121 = vunpack.c.h.b16 %v357
        %v1122 = vunpack.c.l.b16 %v358
        %v1123 = vunpack.c.h.b16 %v358
        %v1124 = vunpack.c.l.b16 %v359
        %v1125 = vunpack.c.h.b16 %v359
        %v1126 = vunpack.c.l.b16 %v360
        %v1127 = vunpack.c.h.b16 %v360
        %v1128 = vunpack.c.l.b16 %v361
        %v1129 = vunpack.c.h.b16 %v361
        %v1130 = vunpack.c.l.b16 %v362
        %v1131 = vunpack.c.h.b16 %v362
        %v1132 = vunpack.c.l.b16 %v363
        %v1133 = vunpack.c.h.b16 %v363
        %v1134 = vunpack.c.l.b16 %v364
        %v1135 = vunpack.c.h.b16 %v364
        %v1136 = vunpack.c.l.b16 %v365
        %v1137 = vunpack.c.h.b16 %v365
        %v1138 = vunpack.c.l.b16 %v366
        %v1139 = vunpack.c.h.b16 %v366
        %v1140 = vunpack.c.l.b16 %v367
        %v1141 = vunpack.c.h.b16 %v367
        %v1142 = vunpack.c.l.b16 %v368
        %v1143 = vunpack.c.h.b16 %v368
        %v1144 = vunpack.c.l.b16 %v369
        %v1145 = vunpack.c.h.b16 %v369
        %v1146 = vunpack.c.l.b16 %v370
        %v1147 = vunpack.c.h.b16 %v370
        %v1148 = vunpack.c.l.b16 %v371
        %v1149 = vunpack.c.h.b16 %v371
        %v1150 = vunpack.c.l.b16 %v372
        %v1151 = vunpack.c.h.b16 %v372
        %v1152 = vunpack.c.l.b16 %v373
        %v1153 = vunpack.c.h.b16 %v373
        %v1154 = vunpack.c.l.b16 %v374
        %v1155 = vunpack.c.h.b16 %v374
        %v1156 = vunpack.c.l.b16 %v375
        %v1157 = vunpack.c.h.b16 %v375
        %v1158 = vunpack.c.l.b16 %v376
        %v1159 = vunpack.c.h.b16 %v376
        %v1160 = vunpack.c.l.b16 %v377
        %v1161 = vunpack.c.h.b16 %v377
        %v1162 = vunpack.c.l.b16 %v378
        %v1163 = vunpack.c.h.b16 %v378
        %v1164 = vunpack.c.l.b16 %v379
        %v1165 = vunpack.c.h.b16 %v379
        %v1166 = vunpack.c.l.b16 %v380
        %v1167 = vunpack.c.h.b16 %v380
        %v1168 = vunpack.c.l.b16 %v381
        %v1169 = vunpack.c.h.b16 %v381
        %v1170 = vunpack.c.l.b16 %v382
        %v1171 = vunpack.c.h.b16 %v382
        %v1172 = vunpack.c.l.b16 %v383
        %v1173 = vunpack.c.h.b16 %v383
        %v1174 = vunpack.c.l.b16 %v384
        %v1175 = vunpack.c.h.b16 %v384
        %v1176 = vunpack.c.l.b16 %v385
        %v1177 = vunpack.c.h.b16 %v385
        %v1178 = vunpack.c.l.b16 %v386
        %v1179 = vunpack.c.h.b16 %v386
        %v1180 = vunpack.c.l.b16 %v387
        %v1181 = vunpack.c.h.b16 %v387
        %v1182 = vunpack.c.l.b16 %v388
        %v1183 = vunpack.c.h.b16 %v388
        %v1184 = vunpack.c.l.b16 %v389
        %v1185 = vunpack.c.h.b16 %v389
        %v1186 = vunpack.c.l.b16 %v390
        %v1187 = vunpack.c.h.b16 %v390
        %v1188 = vunpack.c.l.b16 %v391
        %v1189 = vunpack.c.h.b16 %v391
        %v1190 = vunpack.c.l.b16 %v392
        %v1191 = vunpack.c.h.b16 %v392
        %v1192 = vunpack.c.l.b16 %v393
        %v1193 = vunpack.c.h.b16 %v393
        %v1194 = vunpack.c.l.b16 %v394
        %v1195 = vunpack.c.h.b16 %v394
        %v1196 = vunpack.c.l.b16 %v395
        %v1197 = vunpack.c.h.b16 %v395
        %v1198 = vunpack.c.l.b16 %v396
        %v1199 = vunpack.c.h.b16 %v396
        %v1200 = vunpack.c.l.b16 %v397
        %v1201 = vunpack.c.h.b16 %v397
        %v1202 = vunpack.c.l.b16 %v398
        %v1203 = vunpack.c.h.b16 %v398
        %v1204 = vunpack.c.l.b16 %v399
        %v1205 = vunpack.c.h.b16 %v399
        %v1206 = vunpack.c.l.b16 %v400
        %v1207 = vunpack.c.h.b16 %v400
        %v1208 = vunpack.c.l.b16 %v401
        %v1209 = vunpack.c.h.b16 %v401
        %v1210 = vunpack.c.l.b16 %v402
        %v1211 = vunpack.c.h.b16 %v402
        %v1212 = vunpack.c.l.b16 %v403
        %v1213 = vunpack.c.h.b16 %v403
        %v1214 = vunpack.c.l.b16 %v404
        %v1215 = vunpack.c.h.b16 %v404
        %v1216 = vunpack.c.l.b16 %v405
        %v1217 = vunpack.c.h.b16 %v405
        %v1218 = vunpack.c.l.b16 %v406
        %v1219 = vunpack.c.h.b16 %v406
        %v1220 = vunpack.c.l.b16 %v407
        %v1221 = vunpack.c.h.b16 %v407
        %v1222 = vunpack.c.l.b16 %v408
        %v1223 = vunpack.c.h.b16 %v408
        %v1224 = vunpack.c.l.b16 %v409
        %v1225 = vunpack.c.h.b16 %v409
        %v1226 = vunpack.c.l.b16 %v410
        %v1227 = vunpack.c.h.b16 %v410
        %v1228 = vunpack.c.l.b16 %v411
        %v1229 = vunpack.c.h.b16 %v411
        %v1230 = vunpack.c.l.b16 %v412
        %v1231 = vunpack.c.h.b16 %v412
        %v1232 = vunpack.c.l.b16 %v413
        %v1233 = vunpack.c.h.b16 %v413
        %v1234 = vunpack.c.l.b16 %v414
        %v1235 = vunpack.c.h.b16 %v414
        %v1236 = vunpack.c.l.b16 %v415
        %v1237 = vunpack.c.h.b16 %v415
        %v1238 = vunpack.c.l.b16 %v416
        %v1239 = vunpack.c.h.b16 %v416
        %v1240 = vunpack.c.l.b16 %v417
        %v1241 = vunpack.c.h.b16 %v417
        %v1242 = vunpack.c.l.b16 %v418
        %v1243 = vunpack.c.h.b16 %v418
        %v1244 = vunpack.c.l.b16 %v419
        %v1245 = vunpack.c.h.b16 %v419
        %v1246 = vunpack.c.l.b16 %v420
        %v1247 = vunpack.c.h.b16 %v420
        %v1248 = vunpack.c.l.b16 %v421
        %v1249 = vunpack.c.h.b16 %v421
        %v1250 = vunpack.c.l.b16 %v422
        %v1251 = vunpack.c.h.b16 %v422
        %v1252 = vunpack.c.l.b16 %v423
        %v1253 = vunpack.c.h.b16 %v423
        %v1254 = vunpack.c.l.b16 %v424
        %v1255 = vunpack.c.h.b16 %v424
        %v1256 = vunpack.c.l.b16 %v425
        %v1257 = vunpack.c.h.b16 %v425
        %v1258 = vunpack.c.l.b16 %v426
        %v1259 = vunpack.c.h.b16 %v426
        %v1260 = vunpack.c.l.b16 %v427
        %v1261 = vunpack.c.h.b16 %v427
        %v1262 = vunpack.c.l.b16 %v428
        %v1263 = vunpack.c.h.b16 %v428
        %v1264 = vunpack.c.l.b16 %v429
        %v1265 = vunpack.c.h.b16 %v429
        %v1266 = vunpack.c.l.b16 %v430
        %v1267 = vunpack.c.h.b16 %v430
        %v1268 = vunpack.c.l.b16 %v431
        %v1269 = vunpack.c.h.b16 %v431
        %v1270 = vunpack.c.l.b16 %v432
        %v1271 = vunpack.c.h.b16 %v432
        %v1272 = vunpack.c.l.b16 %v433
        %v1273 = vunpack.c.h.b16 %v433
        %v1274 = vunpack.c.l.b16 %v434
        %v1275 = vunpack.c.h.b16 %v434
        %v1276 = vunpack.c.l.b16 %v435
        %v1277 = vunpack.c.h.b16 %v435
        %v1278 = vunpack.c.l.b16 %v436
        %v1279 = vunpack.c.h.b16 %v436
        %v1280 = vunpack.c.l.b16 %v437
        %v1281 = vunpack.c.h.b16 %v437
        %v1282 = vunpack.c.l.b16 %v438
        %v1283 = vunpack.c.h.b16 %v438
        %v1284 = vunpack.c.l.b16 %v439
        %v1285 = vunpack.c.h.b16 %v439
        %v1286 = vunpack.c.l.b16 %v440
        %v1287 = vunpack.c.h.b16 %v440
        %v1288 = vunpack.c.l.b16 %v441
        %v1289 = vunpack.c.h.b16 %v441
        %v1290 = vunpack.c.l.b16 %v442
        %v1291 = vunpack.c.h.b16 %v442
        %v1292 = vunpack.c.l.b16 %v443
        %v1293 = vunpack.c.h.b16 %v443
        %v1294 = vunpack.c.l.b16 %v444
        %v1295 = vunpack.c.h.b16 %v444
        %v1296 = vunpack.c.l.b16 %v445
        %v1297 = vunpack.c.h.b16 %v445
        %v1298 = vunpack.c.l.b16 %v446
        %v1299 = vunpack.c.h.b16 %v446
        %v1300 = vunpack.c.l.b16 %v447
        %v1301 = vunpack.c.h.b16 %v447
        %v1302 = vunpack.c.l.b16 %v448
        %v1303 = vunpack.c.h.b16 %v448
        %v1304 = vunpack.c.l.b16 %v449
        %v1305 = vunpack.c.h.b16 %v449
        %v1306 = vunpack.c.l.b16 %v450
        %v1307 = vunpack.c.h.b16 %v450
        %v1308 = vunpack.c.l.b16 %v451
        %v1309 = vunpack.c.h.b16 %v451
        %v1310 = vunpack.c.l.b16 %v452
        %v1311 = vunpack.c.h.b16 %v452
        %v1312 = vunpack.c.l.b16 %v453
        %v1313 = vunpack.c.h.b16 %v453
        %v1314 = vunpack.c.l.b16 %v454
        %v1315 = vunpack.c.h.b16 %v454
        %v1316 = vunpack.c.l.b16 %v455
        %v1317 = vunpack.c.h.b16 %v455
        %v1318 = vunpack.c.l.b16 %v456
        %v1319 = vunpack.c.h.b16 %v456
        %v1320 = vunpack.c.l.b16 %v457
        %v1321 = vunpack.c.h.b16 %v457
        %v1322 = vunpack.c.l.b16 %v458
        %v1323 = vunpack.c.h.b16 %v458
        %v1324 = vunpack.c.l.b16 %v459
        %v1325 = vunpack.c.h.b16 %v459
        %v1326 = vunpack.c.l.b16 %v460
        %v1327 = vunpack.c.h.b16 %v460
        %v1328 = vunpack.c.l.b16 %v461
        %v1329 = vunpack.c.h.b16 %v461
        %v1330 = vunpack.c.l.b16 %v462
        %v1331 = vunpack.c.h.b16 %v462
        %v1332 = vunpack.c.l.b16 %v463
        %v1333 = vunpack.c.h.b16 %v463
        %v1334 = vunpack.c.l.b16 %v464
        %v1335 = vunpack.c.h.b16 %v464
        %v1336 = vunpack.c.l.b16 %v465
        %v1337 = vunpack.c.h.b16 %v465
        %v1338 = vunpack.c.l.b16 %v466
        %v1339 = vunpack.c.h.b16 %v466
        %v1340 = vunpack.c.l.b16 %v467
        %v1341 = vunpack.c.h.b16 %v467
        %v1342 = vunpack.c.l.b16 %v468
        %v1343 = vunpack.c.h.b16 %v468
        %v1344 = vunpack.c.l.b16 %v469
        %v1345 = vunpack.c.h.b16 %v469
        %v1346 = vunpack.c.l.b16 %v470
        %v1347 = vunpack.c.h.b16 %v470
        %v1348 = vunpack.c.l.b16 %v471
        %v1349 = vunpack.c.h.b16 %v471
        %v1350 = vunpack.c.l.b16 %v472
        %v1351 = vunpack.c.h.b16 %v472
        %v1352 = vunpack.c.l.b16 %v473
        %v1353 = vunpack.c.h.b16 %v473
        %v1354 = vunpack.c.l.b16 %v474
        %v1355 = vunpack.c.h.b16 %v474
        %v1356 = vunpack.c.l.b16 %v475
        %v1357 = vunpack.c.h.b16 %v475
        %v1358 = vunpack.c.l.b16 %v476
        %v1359 = vunpack.c.h.b16 %v476
        %v1360 = vunpack.c.l.b16 %v477
        %v1361 = vunpack.c.h.b16 %v477
        %v1362 = vunpack.c.l.b16 %v478
        %v1363 = vunpack.c.h.b16 %v478
        %v1364 = vunpack.c.l.b16 %v479
        %v1365 = vunpack.c.h.b16 %v479
        %v1366 = vunpack.c.l.b16 %v480
        %v1367 = vunpack.c.h.b16 %v480
        %v1368 = vunpack.c.l.b16 %v481
        %v1369 = vunpack.c.h.b16 %v481
        %v1370 = vunpack.c.l.b16 %v482
        %v1371 = vunpack.c.h.b16 %v482
        %v1372 = vunpack.c.l.b16 %v483
        %v1373 = vunpack.c.h.b16 %v483
        %v1374 = vunpack.c.l.b16 %v484
        %v1375 = vunpack.c.h.b16 %v484
        %v1376 = vunpack.c.l.b16 %v485
        %v1377 = vunpack.c.h.b16 %v485
        %v1378 = vunpack.c.l.b16 %v486
        %v1379 = vunpack.c.h.b16 %v486
        %v1380 = vunpack.c.l.b16 %v487
        %v1381 = vunpack.c.h.b16 %v487
        %v1382 = vunpack.c.l.b16 %v488
        %v1383 = vunpack.c.h.b16 %v488
        %v1384 = vunpack.c.l.b16 %v489
        %v1385 = vunpack.c.h.b16 %v489
        %v1386 = vunpack.c.l.b16 %v490
        %v1387 = vunpack.c.h.b16 %v490
        %v1388 = vunpack.c.l.b16 %v491
        %v1389 = vunpack.c.h.b16 %v491
        %v1390 = vunpack.c.l.b16 %v492
        %v1391 = vunpack.c.h.b16 %v492
        %v1392 = vunpack.c.l.b16 %v493
        %v1393 = vunpack.c.h.b16 %v493
        %v1394 = vunpack.c.l.b16 %v494
        %v1395 = vunpack.c.h.b16 %v494
        %v1396 = vunpack.c.l.b16 %v495
        %v1397 = vunpack.c.h.b16 %v495
        %v1398 = vunpack.c.l.b16 %v496
        %v1399 = vunpack.c.h.b16 %v496
        %v1400 = vunpack.c.l.b16 %v497
        %v1401 = vunpack.c.h.b16 %v497
        %v1402 = vunpack.c.l.b16 %v498
        %v1403 = vunpack.c.h.b16 %v498
        %v1404 = vunpack.c.l.b16 %v499
        %v1405 = vunpack.c.h.b16 %v499
        %v1406 = vunpack.c.l.b16 %v500
        %v1407 = vunpack.c.h.b16 %v500
        %v1408 = vunpack.c.l.b16 %v501
        %v1409 = vunpack.c.h.b16 %v501
        %v1410 = vunpack.c.l.b16 %v502
        %v1411 = vunpack.c.h.b16 %v502
        %v1412 = vunpack.c.l.b16 %v503
        %v1413 = vunpack.c.h.b16 %v503
        %v1414 = vunpack.c.l.b16 %v504
        %v1415 = vunpack.c.h.b16 %v504
        %v1416 = vunpack.c.l.b16 %v505
        %v1417 = vunpack.c.h.b16 %v505
        %v1418 = vunpack.c.l.b16 %v506
        %v1419 = vunpack.c.h.b16 %v506
        %v1420 = vunpack.c.l.b16 %v507
        %v1421 = vunpack.c.h.b16 %v507
        %v1422 = vunpack.c.l.b16 %v508
        %v1423 = vunpack.c.h.b16 %v508
        %v1424 = vunpack.c.l.b16 %v509
        %v1425 = vunpack.c.h.b16 %v509
        %v1426 = vunpack.c.l.b16 %v510
        %v1427 = vunpack.c.h.b16 %v510
        %v1428 = vunpack.c.l.b16 %v511
        %v1429 = vunpack.c.h.b16 %v511
        %v1430 = vunpack.c.l.b16 %v512
        %v1431 = vunpack.c.h.b16 %v512
        %v1432 = vunpack.c.l.b16 %v513
        %v1433 = vunpack.c.h.b16 %v513
        %v1434 = vunpack.c.l.b16 %v514
        %v1435 = vunpack.c.h.b16 %v514
        %v1436 = vunpack.c.l.b16 %v515
        %v1437 = vunpack.c.h.b16 %v515
        %v1438 = vunpack.c.l.b16 %v516
        %v1439 = vunpack.c.h.b16 %v516
        %v1440 = vunpack.c.l.b16 %v517
        %v1441 = vunpack.c.h.b16 %v517
        %v1442 = vunpack.c.l.b16 %v518
        %v1443 = vunpack.c.h.b16 %v518
        %v1444 = vunpack.c.l.b16 %v519
        %v1445 = vunpack.c.h.b16 %v519
        %v1446 = vunpack.c.l.b16 %v520
        %v1447 = vunpack.c.h.b16 %v520
        %v1448 = vunpack.c.l.b16 %v521
        %v1449 = vunpack.c.h.b16 %v521
        %v1450 = vpack.c.b16 %v942, %v938
        %v1451 = vpack.c.b16 %v943, %v939
        %v1452 = vpack.c.b16 %v944, %v940
        %v1453 = vpack.c.b16 %v945, %v941
        %v1454 = vpack.c.b16 %v950, %v946
        %v1455 = vpack.c.b16 %v951, %v947
        %v1456 = vpack.c.b16 %v952, %v948
        %v1457 = vpack.c.b16 %v953, %v949
        %v1458 = vpack.c.b16 %v958, %v954
        %v1459 = vpack.c.b16 %v959, %v955
        %v1460 = vpack.c.b16 %v960, %v956
        %v1461 = vpack.c.b16 %v961, %v957
        %v1462 = vpack.c.b16 %v966, %v962
        %v1463 = vpack.c.b16 %v967, %v963
        %v1464 = vpack.c.b16 %v968, %v964
        %v1465 = vpack.c.b16 %v969, %v965
        %v1466 = vpack.c.b16 %v974, %v970
        %v1467 = vpack.c.b16 %v975, %v971
        %v1468 = vpack.c.b16 %v976, %v972
        %v1469 = vpack.c.b16 %v977, %v973
        %v1470 = vpack.c.b16 %v982, %v978
        %v1471 = vpack.c.b16 %v983, %v979
        %v1472 = vpack.c.b16 %v984, %v980
        %v1473 = vpack.c.b16 %v985, %v981
        %v1474 = vpack.c.b16 %v990, %v986
        %v1475 = vpack.c.b16 %v991, %v987
        %v1476 = vpack.c.b16 %v992, %v988
        %v1477 = vpack.c.b16 %v993, %v989
        %v1478 = vpack.c.b16 %v998, %v994
        %v1479 = vpack.c.b16 %v999, %v995
        %v1480 = vpack.c.b16 %v1000, %v996
        %v1481 = vpack.c.b16 %v1001, %v997
        %v1482 = vpack.c.b16 %v1006, %v1002
        %v1483 = vpack.c.b16 %v1007, %v1003
        %v1484 = vpack.c.b16 %v1008, %v1004
        %v1485 = vpack.c.b16 %v1009, %v1005
        %v1486 = vpack.c.b16 %v1014, %v1010
        %v1487 = vpack.c.b16 %v1015, %v1011
        %v1488 = vpack.c.b16 %v1016, %v1012
        %v1489 = vpack.c.b16 %v1017, %v1013
        %v1490 = vpack.c.b16 %v1022, %v1018
        %v1491 = vpack.c.b16 %v1023, %v1019
        %v1492 = vpack.c.b16 %v1024, %v1020
        %v1493 = vpack.c.b16 %v1025, %v1021
        %v1494 = vpack.c.b16 %v1030, %v1026
        %v1495 = vpack.c.b16 %v1031, %v1027
        %v1496 = vpack.c.b16 %v1032, %v1028
        %v1497 = vpack.c.b16 %v1033, %v1029
        %v1498 = vpack.c.b16 %v1038, %v1034
        %v1499 = vpack.c.b16 %v1039, %v1035
        %v1500 = vpack.c.b16 %v1040, %v1036
        %v1501 = vpack.c.b16 %v1041, %v1037
        %v1502 = vpack.c.b16 %v1046, %v1042
        %v1503 = vpack.c.b16 %v1047, %v1043
        %v1504 = vpack.c.b16 %v1048, %v1044
        %v1505 = vpack.c.b16 %v1049, %v1045
        %v1506 = vpack.c.b16 %v1054, %v1050
        %v1507 = vpack.c.b16 %v1055, %v1051
        %v1508 = vpack.c.b16 %v1056, %v1052
        %v1509 = vpack.c.b16 %v1057, %v1053
        %v1510 = vpack.c.b16 %v1062, %v1058
        %v1511 = vpack.c.b16 %v1063, %v1059
        %v1512 = vpack.c.b16 %v1064, %v1060
        %v1513 = vpack.c.b16 %v1065, %v1061
        %v1514 = vpack.c.b16 %v1070, %v1066
        %v1515 = vpack.c.b16 %v1071, %v1067
        %v1516 = vpack.c.b16 %v1072, %v1068
        %v1517 = vpack.c.b16 %v1073, %v1069
        %v1518 = vpack.c.b16 %v1078, %v1074
        %v1519 = vpack.c.b16 %v1079, %v1075
        %v1520 = vpack.c.b16 %v1080, %v1076
        %v1521 = vpack.c.b16 %v1081, %v1077
        %v1522 = vpack.c.b16 %v1086, %v1082
        %v1523 = vpack.c.b16 %v1087, %v1083
        %v1524 = vpack.c.b16 %v1088, %v1084
        %v1525 = vpack.c.b16 %v1089, %v1085
        %v1526 = vpack.c.b16 %v1094, %v1090
        %v1527 = vpack.c.b16 %v1095, %v1091
        %v1528 = vpack.c.b16 %v1096, %v1092
        %v1529 = vpack.c.b16 %v1097, %v1093
        %v1530 = vpack.c.b16 %v1102, %v1098
        %v1531 = vpack.c.b16 %v1103, %v1099
        %v1532 = vpack.c.b16 %v1104, %v1100
        %v1533 = vpack.c.b16 %v1105, %v1101
        %v1534 = vpack.c.b16 %v1110, %v1106
        %v1535 = vpack.c.b16 %v1111, %v1107
        %v1536 = vpack.c.b16 %v1112, %v1108
        %v1537 = vpack.c.b16 %v1113, %v1109
        %v1538 = vpack.c.b16 %v1118, %v1114
        %v1539 = vpack.c.b16 %v1119, %v1115
        %v1540 = vpack.c.b16 %v1120, %v1116
        %v1541 = vpack.c.b16 %v1121, %v1117
        %v1542 = vpack.c.b16 %v1126, %v1122
        %v1543 = vpack.c.b16 %v1127, %v1123
        %v1544 = vpack.c.b16 %v1128, %v1124
        %v1545 = vpack.c.b16 %v1129, %v1125
        %v1546 = vpack.c.b16 %v1134, %v1130
        %v1547 = vpack.c.b16 %v1135, %v1131
        %v1548 = vpack.c.b16 %v1136, %v1132
        %v1549 = vpack.c.b16 %v1137, %v1133
        %v1550 = vpack.c.b16 %v1142, %v1138
        %v1551 = vpack.c.b16 %v1143, %v1139
        %v1552 = vpack.c.b16 %v1144, %v1140
        %v1553 = vpack.c.b16 %v1145, %v1141
        %v1554 = vpack.c.b16 %v1150, %v1146
        %v1555 = vpack.c.b16 %v1151, %v1147
        %v1556 = vpack.c.b16 %v1152, %v1148
        %v1557 = vpack.c.b16 %v1153, %v1149
        %v1558 = vpack.c.b16 %v1158, %v1154
        %v1559 = vpack.c.b16 %v1159, %v1155
        %v1560 = vpack.c.b16 %v1160, %v1156
        %v1561 = vpack.c.b16 %v1161, %v1157
        %v1562 = vpack.c.b16 %v1166, %v1162
        %v1563 = vpack.c.b16 %v1167, %v1163
        %v1564 = vpack.c.b16 %v1168, %v1164
        %v1565 = vpack.c.b16 %v1169, %v1165
        %v1566 = vpack.c.b16 %v1174, %v1170
        %v1567 = vpack.c.b16 %v1175, %v1171
        %v1568 = vpack.c.b16 %v1176, %v1172
        %v1569 = vpack.c.b16 %v1177, %v1173
        %v1570 = vpack.c.b16 %v1182, %v1178
        %v1571 = vpack.c.b16 %v1183, %v1179
        %v1572 = vpack.c.b16 %v1184, %v1180
        %v1573 = vpack.c.b16 %v1185, %v1181
        %v1574 = vpack.c.b16 %v1190, %v1186
        %v1575 = vpack.c.b16 %v1191, %v1187
        %v1576 = vpack.c.b16 %v1192, %v1188
        %v1577 = vpack.c.b16 %v1193, %v1189
        %v1578 = vpack.c.b16 %v1198, %v1194
        %v1579 = vpack.c.b16 %v1199, %v1195
        %v1580 = vpack.c.b16 %v1200, %v1196
        %v1581 = vpack.c.b16 %v1201, %v1197
        %v1582 = vpack.c.b16 %v1206, %v1202
        %v1583 = vpack.c.b16 %v1207, %v1203
        %v1584 = vpack.c.b16 %v1208, %v1204
        %v1585 = vpack.c.b16 %v1209, %v1205
        %v1586 = vpack.c.b16 %v1214, %v1210
        %v1587 = vpack.c.b16 %v1215, %v1211
        %v1588 = vpack.c.b16 %v1216, %v1212
        %v1589 = vpack.c.b16 %v1217, %v1213
        %v1590 = vpack.c.b16 %v1222, %v1218
        %v1591 = vpack.c.b16 %v1223, %v1219
        %v1592 = vpack.c.b16 %v1224, %v1220
        %v1593 = vpack.c.b16 %v1225, %v1221
        %v1594 = vpack.c.b16 %v1230, %v1226
        %v1595 = vpack.c.b16 %v1231, %v1227
        %v1596 = vpack.c.b16 %v1232, %v1228
        %v1597 = vpack.c.b16 %v1233, %v1229
        %v1598 = vpack.c.b16 %v1238, %v1234
        %v1599 = vpack.c.b16 %v1239, %v1235
        %v1600 = vpack.c.b16 %v1240, %v1236
        %v1601 = vpack.c.b16 %v1241, %v1237
        %v1602 = vpack.c.b16 %v1246, %v1242
        %v1603 = vpack.c.b16 %v1247, %v1243
        %v1604 = vpack.c.b16 %v1248, %v1244
        %v1605 = vpack.c.b16 %v1249, %v1245
        %v1606 = vpack.c.b16 %v1254, %v1250
        %v1607 = vpack.c.b16 %v1255, %v1251
        %v1608 = vpack.c.b16 %v1256, %v1252
        %v1609 = vpack.c.b16 %v1257, %v1253
        %v1610 = vpack.c.b16 %v1262, %v1258
        %v1611 = vpack.c.b16 %v1263, %v1259
        %v1612 = vpack.c.b16 %v1264, %v1260
        %v1613 = vpack.c.b16 %v1265, %v1261
        %v1614 = vpack.c.b16 %v1270, %v1266
        %v1615 = vpack.c.b16 %v1271, %v1267
        %v1616 = vpack.c.b16 %v1272, %v1268
        %v1617 = vpack.c.b16 %v1273, %v1269
        %v1618 = vpack.c.b16 %v1278, %v1274
        %v1619 = vpack.c.b16 %v1279, %v1275
        %v1620 = vpack.c.b16 %v1280, %v1276
        %v1621 = vpack.c.b16 %v1281, %v1277
        %v1622 = vpack.c.b16 %v1286, %v1282
        %v1623 = vpack.c.b16 %v1287, %v1283
        %v1624 = vpack.c.b16 %v1288, %v1284
        %v1625 = vpack.c.b16 %v1289, %v1285
        %v1626 = vpack.c.b16 %v1294, %v1290
        %v1627 = vpack.c.b16 %v1295, %v1291
        %v1628 = vpack.c.b16 %v1296, %v1292
        %v1629 = vpack.c.b16 %v1297, %v1293
        %v1630 = vpack.c.b16 %v1302, %v1298
        %v1631 = vpack.c.b16 %v1303, %v1299
        %v1632 = vpack.c.b16 %v1304, %v1300
        %v1633 = vpack.c.b16 %v1305, %v1301
        %v1634 = vpack.c.b16 %v1310, %v1306
        %v1635 = vpack.c.b16 %v1311, %v1307
        %v1636 = vpack.c.b16 %v1312, %v1308
        %v1637 = vpack.c.b16 %v1313, %v1309
        %v1638 = vpack.c.b16 %v1318, %v1314
        %v1639 = vpack.c.b16 %v1319, %v1315
        %v1640 = vpack.c.b16 %v1320, %v1316
        %v1641 = vpack.c.b16 %v1321, %v1317
        %v1642 = vpack.c.b16 %v1326, %v1322
        %v1643 = vpack.c.b16 %v1327, %v1323
        %v1644 = vpack.c.b16 %v1328, %v1324
        %v1645 = vpack.c.b16 %v1329, %v1325
        %v1646 = vpack.c.b16 %v1334, %v1330
        %v1647 = vpack.c.b16 %v1335, %v1331
        %v1648 = vpack.c.b16 %v1336, %v1332
        %v1649 = vpack.c.b16 %v1337, %v1333
        %v1650 = vpack.c.b16 %v1342, %v1338
        %v1651 = vpack.c.b16 %v1343, %v1339
        %v1652 = vpack.c.b16 %v1344, %v1340
        %v1653 = vpack.c.b16 %v1345, %v1341
        %v1654 = vpack.c.b16 %v1350, %v1346
        %v1655 = vpack.c.b16 %v1351, %v1347
        %v1656 = vpack.c.b16 %v1352, %v1348
        %v1657 = vpack.c.b16 %v1353, %v1349
        %v1658 = vpack.c.b16 %v1358, %v1354
        %v1659 = vpack.c.b16 %v1359, %v1355
        %v1660 = vpack.c.b16 %v1360, %v1356
        %v1661 = vpack.c.b16 %v1361, %v1357
        %v1662 = vpack.c.b16 %v1366, %v1362
        %v1663 = vpack.c.b16 %v1367, %v1363
        %v1664 = vpack.c.b16 %v1368, %v1364
        %v1665 = vpack.c.b16 %v1369, %v1365
        %v1666 = vpack.c.b16 %v1374, %v1370
        %v1667 = vpack.c.b16 %v1375, %v1371
        %v1668 = vpack.c.b16 %v1376, %v1372
        %v1669 = vpack.c.b16 %v1377, %v1373
        %v1670 = vpack.c.b16 %v1382, %v1378
        %v1671 = vpack.c.b16 %v1383, %v1379
        %v1672 = vpack.c.b16 %v1384, %v1380
        %v1673 = vpack.c.b16 %v1385, %v1381
        %v1674 = vpack.c.b16 %v1390, %v1386
        %v1675 = vpack.c.b16 %v1391, %v1387
        %v1676 = vpack.c.b16 %v1392, %v1388
        %v1677 = vpack.c.b16 %v1393, %v1389
        %v1678 = vpack.c.b16 %v1398, %v1394
        %v1679 = vpack.c.b16 %v1399, %v1395
        %v1680 = vpack.c.b16 %v1400, %v1396
        %v1681 = vpack.c.b16 %v1401, %v1397
        %v1682 = vpack.c.b16 %v1406, %v1402
        %v1683 = vpack.c.b16 %v1407, %v1403
        %v1684 = vpack.c.b16 %v1408, %v1404
        %v1685 = vpack.c.b16 %v1409, %v1405
        %v1686 = vpack.c.b16 %v1414, %v1410
        %v1687 = vpack.c.b16 %v1415, %v1411
        %v1688 = vpack.c.b16 %v1416, %v1412
        %v1689 = vpack.c.b16 %v1417, %v1413
        %v1690 = vpack.c.b16 %v1422, %v1418
        %v1691 = vpack.c.b16 %v1423, %v1419
        %v1692 = vpack.c.b16 %v1424, %v1420
        %v1693 = vpack.c.b16 %v1425, %v1421
        %v1694 = vpack.c.b16 %v1430, %v1426
        %v1695 = vpack.c.b16 %v1431, %v1427
        %v1696 = vpack.c.b16 %v1432, %v1428
        %v1697 = vpack.c.b16 %v1433, %v1429
        %v1698 = vpack.c.b16 %v1438, %v1434
        %v1699 = vpack.c.b16 %v1439, %v1435
        %v1700 = vpack.c.b16 %v1440, %v1436
        %v1701 = vpack.c.b16 %v1441, %v1437
        %v1702 = vpack.c.b16 %v1446, %v1442
        %v1703 = vpack.c.b16 %v1447, %v1443
        %v1704 = vpack.c.b16 %v1448, %v1444
        %v1705 = vpack.c.b16 %v1449, %v1445
        %1962 = vmatprep.subr.bf16.mxu0 %v1451
        %1963 = vmatpush1.bf16.msra.mxu0 %v1450
        %1964 = vmatprep.subr.bf16.mxu0 %v1455
        %1965 = vmatpush1.bf16.msra.mxu0 %v1454
        %1966 = vmatprep.subr.bf16.mxu0 %v1459
        %1967 = vmatpush1.bf16.msra.mxu0 %v1458
        %1968 = vmatprep.subr.bf16.mxu0 %v1463
        %1969 = vmatpush1.bf16.msra.mxu0 %v1462
        %1970 = vmatprep.subr.bf16.mxu0 %v1467
        %1971 = vmatpush1.bf16.msra.mxu0 %v1466
        %1972 = vmatprep.subr.bf16.mxu0 %v1471
        %1973 = vmatpush1.bf16.msra.mxu0 %v1470
        %1974 = vmatprep.subr.bf16.mxu0 %v1475
        %1975 = vmatpush1.bf16.msra.mxu0 %v1474
        %1976 = vmatprep.subr.bf16.mxu0 %v1479
        %1977 = vmatpush1.bf16.msra.mxu0 %v1478
        %1978 = vmatprep.subr.bf16.mxu0 %v1483
        %1979 = vmatpush1.bf16.msra.mxu0 %v1482
        %1980 = vmatprep.subr.bf16.mxu0 %v1487
        %1981 = vmatpush1.bf16.msra.mxu0 %v1486
        %1982 = vmatprep.subr.bf16.mxu0 %v1491
        %1983 = vmatpush1.bf16.msra.mxu0 %v1490
        %1984 = vmatprep.subr.bf16.mxu0 %v1495
        %1985 = vmatpush1.bf16.msra.mxu0 %v1494
        %1986 = vmatprep.subr.bf16.mxu0 %v1499
        %1987 = vmatpush1.bf16.msra.mxu0 %v1498
        %1988 = vmatprep.subr.bf16.mxu0 %v1503
        %1989 = vmatpush1.bf16.msra.mxu0 %v1502
        %1990 = vmatprep.subr.bf16.mxu0 %v1507
        %1991 = vmatpush1.bf16.msra.mxu0 %v1506
        %1992 = vmatprep.subr.bf16.mxu0 %v1511
        %1993 = vmatpush1.bf16.msra.mxu0 %v1510
        %1994 = vmatprep.mubr.bf16.mxu0 %v619
        %1995 = vmatmul.mubr.bf16.gmra.mrb[0].mxu0 %v618
        %v1996 = vpop.f32.mrb[0].mxu0
        %v1997 = vadd.f32 0.0, %v1996
        %v1998 = vpop.f32.mrb[0].mxu0
        %v1999 = vadd.f32 0.0, %v1998
        %v2000 = vpop.f32.mrb[0].mxu0
        %v2001 = vadd.f32 0.0, %v2000
        %v2002 = vpop.f32.mrb[0].mxu0
        %v2003 = vadd.f32 0.0, %v2002
        %2004 = vmatprep.mubr.bf16.mxu0 %v627
        %2005 = vmatmul.mubr.bf16.gmra.mrb[0].mxu0 %v626
        %v2006 = vpop.f32.mrb[0].mxu0
        %v2007 = vadd.f32 0.0, %v2006
        %v2008 = vpop.f32.mrb[0].mxu0
        %v2009 = vadd.f32 0.0, %v2008
        %v2010 = vpop.f32.mrb[0].mxu0
        %v2011 = vadd.f32 0.0, %v2010
        %v2012 = vpop.f32.mrb[0].mxu0
        %v2013 = vadd.f32 0.0, %v2012
        %2014 = vmatprep.mubr.bf16.mxu0 %v635
        %2015 = vmatmul.mubr.bf16.gmra.mrb[0].mxu0 %v634
        %v2016 = vpop.f32.mrb[0].mxu0
        %v2017 = vadd.f32 0.0, %v2016
        %v2018 = vpop.f32.mrb[0].mxu0
        %v2019 = vadd.f32 0.0, %v2018
        %v2020 = vpop.f32.mrb[0].mxu0
        %v2021 = vadd.f32 0.0, %v2020
        %v2022 = vpop.f32.mrb[0].mxu0
        %v2023 = vadd.f32 0.0, %v2022
        %2024 = vmatprep.mubr.bf16.mxu0 %v643
        %2025 = vmatmul.mubr.bf16.gmra.mrb[0].mxu0 %v642
        %v2026 = vpop.f32.mrb[0].mxu0
        %v2027 = vadd.f32 0.0, %v2026
        %v2028 = vpop.f32.mrb[0].mxu0
        %v2029 = vadd.f32 0.0, %v2028
        %v2030 = vpop.f32.mrb[0].mxu0
        %v2031 = vadd.f32 0.0, %v2030
        %v2032 = vpop.f32.mrb[0].mxu0
        %v2033 = vadd.f32 0.0, %v2032
        %2034 = vdwg.mxu0
        %2035 = vmatprep.subr.bf16.mxu0 %v1515
        %2036 = vmatpush1.bf16.msra.mxu0 %v1514
        %2037 = vmatprep.subr.bf16.mxu0 %v1519
        %2038 = vmatpush1.bf16.msra.mxu0 %v1518
        %2039 = vmatprep.subr.bf16.mxu0 %v1523
        %2040 = vmatpush1.bf16.msra.mxu0 %v1522
        %2041 = vmatprep.subr.bf16.mxu0 %v1527
        %2042 = vmatpush1.bf16.msra.mxu0 %v1526
        %2043 = vmatprep.subr.bf16.mxu0 %v1531
        %2044 = vmatpush1.bf16.msra.mxu0 %v1530
        %2045 = vmatprep.subr.bf16.mxu0 %v1535
        %2046 = vmatpush1.bf16.msra.mxu0 %v1534
        %2047 = vmatprep.subr.bf16.mxu0 %v1539
        %2048 = vmatpush1.bf16.msra.mxu0 %v1538
        %2049 = vmatprep.subr.bf16.mxu0 %v1543
        %2050 = vmatpush1.bf16.msra.mxu0 %v1542
        %2051 = vmatprep.subr.bf16.mxu0 %v1547
        %2052 = vmatpush1.bf16.msra.mxu0 %v1546
        %2053 = vmatprep.subr.bf16.mxu0 %v1551
        %2054 = vmatpush1.bf16.msra.mxu0 %v1550
        %2055 = vmatprep.subr.bf16.mxu0 %v1555
        %2056 = vmatpush1.bf16.msra.mxu0 %v1554
        %2057 = vmatprep.subr.bf16.mxu0 %v1559
        %2058 = vmatpush1.bf16.msra.mxu0 %v1558
        %2059 = vmatprep.subr.bf16.mxu0 %v1563
        %2060 = vmatpush1.bf16.msra.mxu0 %v1562
        %2061 = vmatprep.subr.bf16.mxu0 %v1567
        %2062 = vmatpush1.bf16.msra.mxu0 %v1566
        %2063 = vmatprep.subr.bf16.mxu0 %v1571
        %2064 = vmatpush1.bf16.msra.mxu0 %v1570
        %2065 = vmatprep.subr.bf16.mxu0 %v1575
        %2066 = vmatpush1.bf16.msra.mxu0 %v1574
        %2067 = vmatprep.mubr.bf16.mxu0 %v621
        %2068 = vmatmul.mubr.bf16.gmra.mrb[0].mxu0 %v620
        %v2069 = vpop.f32.mrb[0].mxu0
        %v2070 = vadd.f32 %v1997, %v2069
        %v2071 = vpop.f32.mrb[0].mxu0
        %v2072 = vadd.f32 %v1999, %v2071
        %v2073 = vpop.f32.mrb[0].mxu0
        %v2074 = vadd.f32 %v2001, %v2073
        %v2075 = vpop.f32.mrb[0].mxu0
        %v2076 = vadd.f32 %v2003, %v2075
        %2077 = vmatprep.mubr.bf16.mxu0 %v629
        %2078 = vmatmul.mubr.bf16.gmra.mrb[0].mxu0 %v628
        %v2079 = vpop.f32.mrb[0].mxu0
        %v2080 = vadd.f32 %v2007, %v2079
        %v2081 = vpop.f32.mrb[0].mxu0
        %v2082 = vadd.f32 %v2009, %v2081
        %v2083 = vpop.f32.mrb[0].mxu0
        %v2084 = vadd.f32 %v2011, %v2083
        %v2085 = vpop.f32.mrb[0].mxu0
        %v2086 = vadd.f32 %v2013, %v2085
        %2087 = vmatprep.mubr.bf16.mxu0 %v637
        %2088 = vmatmul.mubr.bf16.gmra.mrb[0].mxu0 %v636
        %v2089 = vpop.f32.mrb[0].mxu0
        %v2090 = vadd.f32 %v2017, %v2089
        %v2091 = vpop.f32.mrb[0].mxu0
        %v2092 = vadd.f32 %v2019, %v2091
        %v2093 = vpop.f32.mrb[0].mxu0
        %v2094 = vadd.f32 %v2021, %v2093
        %v2095 = vpop.f32.mrb[0].mxu0
        %v2096 = vadd.f32 %v2023, %v2095
        %2097 = vmatprep.mubr.bf16.mxu0 %v645
        %2098 = vmatmul.mubr.bf16.gmra.mrb[0].mxu0 %v644
        %v2099 = vpop.f32.mrb[0].mxu0
        %v2100 = vadd.f32 %v2027, %v2099
        %v2101 = vpop.f32.mrb[0].mxu0
        %v2102 = vadd.f32 %v2029, %v2101
        %v2103 = vpop.f32.mrb[0].mxu0
        %v2104 = vadd.f32 %v2031, %v2103
        %v2105 = vpop.f32.mrb[0].mxu0
        %v2106 = vadd.f32 %v2033, %v2105
        %2107 = vdwg.mxu0
        %2108 = vmatprep.subr.bf16.mxu0 %v1579
        %2109 = vmatpush1.bf16.msra.mxu0 %v1578
        %2110 = vmatprep.subr.bf16.mxu0 %v1583
        %2111 = vmatpush1.bf16.msra.mxu0 %v1582
        %2112 = vmatprep.subr.bf16.mxu0 %v1587
        %2113 = vmatpush1.bf16.msra.mxu0 %v1586
        %2114 = vmatprep.subr.bf16.mxu0 %v1591
        %2115 = vmatpush1.bf16.msra.mxu0 %v1590
        %2116 = vmatprep.subr.bf16.mxu0 %v1595
        %2117 = vmatpush1.bf16.msra.mxu0 %v1594
        %2118 = vmatprep.subr.bf16.mxu0 %v1599
        %2119 = vmatpush1.bf16.msra.mxu0 %v1598
        %2120 = vmatprep.subr.bf16.mxu0 %v1603
        %2121 = vmatpush1.bf16.msra.mxu0 %v1602
        %2122 = vmatprep.subr.bf16.mxu0 %v1607
        %2123 = vmatpush1.bf16.msra.mxu0 %v1606
        %2124 = vmatprep.subr.bf16.mxu0 %v1611
        %2125 = vmatpush1.bf16.msra.mxu0 %v1610
        %2126 = vmatprep.subr.bf16.mxu0 %v1615
        %2127 = vmatpush1.bf16.msra.mxu0 %v1614
        %2128 = vmatprep.subr.bf16.mxu0 %v1619
        %2129 = vmatpush1.bf16.msra.mxu0 %v1618
        %2130 = vmatprep.subr.bf16.mxu0 %v1623
        %2131 = vmatpush1.bf16.msra.mxu0 %v1622
        %2132 = vmatprep.subr.bf16.mxu0 %v1627
        %2133 = vmatpush1.bf16.msra.mxu0 %v1626
        %2134 = vmatprep.subr.bf16.mxu0 %v1631
        %2135 = vmatpush1.bf16.msra.mxu0 %v1630
        %2136 = vmatprep.subr.bf16.mxu0 %v1635
        %2137 = vmatpush1.bf16.msra.mxu0 %v1634
        %2138 = vmatprep.subr.bf16.mxu0 %v1639
        %2139 = vmatpush1.bf16.msra.mxu0 %v1638
        %2140 = vmatprep.mubr.bf16.mxu0 %v623
        %2141 = vmatmul.mubr.bf16.gmra.mrb[0].mxu0 %v622
        %v2142 = vpop.f32.mrb[0].mxu0
        %v2143 = vadd.f32 %v2070, %v2142
        %v2144 = vpop.f32.mrb[0].mxu0
        %v2145 = vadd.f32 %v2072, %v2144
        %v2146 = vpop.f32.mrb[0].mxu0
        %v2147 = vadd.f32 %v2074, %v2146
        %v2148 = vpop.f32.mrb[0].mxu0
        %v2149 = vadd.f32 %v2076, %v2148
        %2150 = vmatprep.mubr.bf16.mxu0 %v631
        %2151 = vmatmul.mubr.bf16.gmra.mrb[0].mxu0 %v630
        %v2152 = vpop.f32.mrb[0].mxu0
        %v2153 = vadd.f32 %v2080, %v2152
        %v2154 = vpop.f32.mrb[0].mxu0
        %v2155 = vadd.f32 %v2082, %v2154
        %v2156 = vpop.f32.mrb[0].mxu0
        %v2157 = vadd.f32 %v2084, %v2156
        %v2158 = vpop.f32.mrb[0].mxu0
        %v2159 = vadd.f32 %v2086, %v2158
        %2160 = vmatprep.mubr.bf16.mxu0 %v639
        %2161 = vmatmul.mubr.bf16.gmra.mrb[0].mxu0 %v638
        %v2162 = vpop.f32.mrb[0].mxu0
        %v2163 = vadd.f32 %v2090, %v2162
        %v2164 = vpop.f32.mrb[0].mxu0
        %v2165 = vadd.f32 %v2092, %v2164
        %v2166 = vpop.f32.mrb[0].mxu0
        %v2167 = vadd.f32 %v2094, %v2166
        %v2168 = vpop.f32.mrb[0].mxu0
        %v2169 = vadd.f32 %v2096, %v2168
        %2170 = vmatprep.mubr.bf16.mxu0 %v647
        %2171 = vmatmul.mubr.bf16.gmra.mrb[0].mxu0 %v646
        %v2172 = vpop.f32.mrb[0].mxu0
        %v2173 = vadd.f32 %v2100, %v2172
        %v2174 = vpop.f32.mrb[0].mxu0
        %v2175 = vadd.f32 %v2102, %v2174
        %v2176 = vpop.f32.mrb[0].mxu0
        %v2177 = vadd.f32 %v2104, %v2176
        %v2178 = vpop.f32.mrb[0].mxu0
        %v2179 = vadd.f32 %v2106, %v2178
        %2180 = vdwg.mxu0
        %2181 = vmatprep.subr.bf16.mxu0 %v1643
        %2182 = vmatpush1.bf16.msra.mxu0 %v1642
        %2183 = vmatprep.subr.bf16.mxu0 %v1647
        %2184 = vmatpush1.bf16.msra.mxu0 %v1646
        %2185 = vmatprep.subr.bf16.mxu0 %v1651
        %2186 = vmatpush1.bf16.msra.mxu0 %v1650
        %2187 = vmatprep.subr.bf16.mxu0 %v1655
        %2188 = vmatpush1.bf16.msra.mxu0 %v1654
        %2189 = vmatprep.subr.bf16.mxu0 %v1659
        %2190 = vmatpush1.bf16.msra.mxu0 %v1658
        %2191 = vmatprep.subr.bf16.mxu0 %v1663
        %2192 = vmatpush1.bf16.msra.mxu0 %v1662
        %2193 = vmatprep.subr.bf16.mxu0 %v1667
        %2194 = vmatpush1.bf16.msra.mxu0 %v1666
        %2195 = vmatprep.subr.bf16.mxu0 %v1671
        %2196 = vmatpush1.bf16.msra.mxu0 %v1670
        %2197 = vmatprep.subr.bf16.mxu0 %v1675
        %2198 = vmatpush1.bf16.msra.mxu0 %v1674
        %2199 = vmatprep.subr.bf16.mxu0 %v1679
        %2200 = vmatpush1.bf16.msra.mxu0 %v1678
        %2201 = vmatprep.subr.bf16.mxu0 %v1683
        %2202 = vmatpush1.bf16.msra.mxu0 %v1682
        %2203 = vmatprep.subr.bf16.mxu0 %v1687
        %2204 = vmatpush1.bf16.msra.mxu0 %v1686
        %2205 = vmatprep.subr.bf16.mxu0 %v1691
        %2206 = vmatpush1.bf16.msra.mxu0 %v1690
        %2207 = vmatprep.subr.bf16.mxu0 %v1695
        %2208 = vmatpush1.bf16.msra.mxu0 %v1694
        %2209 = vmatprep.subr.bf16.mxu0 %v1699
        %2210 = vmatpush1.bf16.msra.mxu0 %v1698
        %2211 = vmatprep.subr.bf16.mxu0 %v1703
        %2212 = vmatpush1.bf16.msra.mxu0 %v1702
        %2213 = vmatprep.mubr.bf16.mxu0 %v625
        %2214 = vmatmul.mubr.bf16.gmra.mrb[0].mxu0 %v624
        %v2215 = vpop.f32.mrb[0].mxu0
        %v2216 = vadd.f32 %v2143, %v2215
        %v2217 = vpop.f32.mrb[0].mxu0
        %v2218 = vadd.f32 %v2145, %v2217
        %v2219 = vpop.f32.mrb[0].mxu0
        %v2220 = vadd.f32 %v2147, %v2219
        %v2221 = vpop.f32.mrb[0].mxu0
        %v2222 = vadd.f32 %v2149, %v2221
        %2223 = vmatprep.mubr.bf16.mxu0 %v633
        %2224 = vmatmul.mubr.bf16.gmra.mrb[0].mxu0 %v632
        %v2225 = vpop.f32.mrb[0].mxu0
        %v2226 = vadd.f32 %v2153, %v2225
        %v2227 = vpop.f32.mrb[0].mxu0
        %v2228 = vadd.f32 %v2155, %v2227
        %v2229 = vpop.f32.mrb[0].mxu0
        %v2230 = vadd.f32 %v2157, %v2229
        %v2231 = vpop.f32.mrb[0].mxu0
        %v2232 = vadd.f32 %v2159, %v2231
        %2233 = vmatprep.mubr.bf16.mxu0 %v641
        %2234 = vmatmul.mubr.bf16.gmra.mrb[0].mxu0 %v640
        %v2235 = vpop.f32.mrb[0].mxu0
        %v2236 = vadd.f32 %v2163, %v2235
        %v2237 = vpop.f32.mrb[0].mxu0
        %v2238 = vadd.f32 %v2165, %v2237
        %v2239 = vpop.f32.mrb[0].mxu0
        %v2240 = vadd.f32 %v2167, %v2239
        %v2241 = vpop.f32.mrb[0].mxu0
        %v2242 = vadd.f32 %v2169, %v2241
        %2243 = vmatprep.mubr.bf16.mxu0 %v649
        %2244 = vmatmul.mubr.bf16.gmra.mrb[0].mxu0 %v648
        %v2245 = vpop.f32.mrb[0].mxu0
        %v2246 = vadd.f32 %v2173, %v2245
        %v2247 = vpop.f32.mrb[0].mxu0
        %v2248 = vadd.f32 %v2175, %v2247
        %v2249 = vpop.f32.mrb[0].mxu0
        %v2250 = vadd.f32 %v2177, %v2249
        %v2251 = vpop.f32.mrb[0].mxu0
        %v2252 = vadd.f32 %v2179, %v2251
        %2253 = vdwg.mxu0
        %2254 = vmatprep.subr.bf16.mxu0 %v1453
        %2255 = vmatpush1.bf16.msra.mxu0 %v1452
        %2256 = vmatprep.subr.bf16.mxu0 %v1457
        %2257 = vmatpush1.bf16.msra.mxu0 %v1456
        %2258 = vmatprep.subr.bf16.mxu0 %v1461
        %2259 = vmatpush1.bf16.msra.mxu0 %v1460
        %2260 = vmatprep.subr.bf16.mxu0 %v1465
        %2261 = vmatpush1.bf16.msra.mxu0 %v1464
        %2262 = vmatprep.subr.bf16.mxu0 %v1469
        %2263 = vmatpush1.bf16.msra.mxu0 %v1468
        %2264 = vmatprep.subr.bf16.mxu0 %v1473
        %2265 = vmatpush1.bf16.msra.mxu0 %v1472
        %2266 = vmatprep.subr.bf16.mxu0 %v1477
        %2267 = vmatpush1.bf16.msra.mxu0 %v1476
        %2268 = vmatprep.subr.bf16.mxu0 %v1481
        %2269 = vmatpush1.bf16.msra.mxu0 %v1480
        %2270 = vmatprep.subr.bf16.mxu0 %v1485
        %2271 = vmatpush1.bf16.msra.mxu0 %v1484
        %2272 = vmatprep.subr.bf16.mxu0 %v1489
        %2273 = vmatpush1.bf16.msra.mxu0 %v1488
        %2274 = vmatprep.subr.bf16.mxu0 %v1493
        %2275 = vmatpush1.bf16.msra.mxu0 %v1492
        %2276 = vmatprep.subr.bf16.mxu0 %v1497
        %2277 = vmatpush1.bf16.msra.mxu0 %v1496
        %2278 = vmatprep.subr.bf16.mxu0 %v1501
        %2279 = vmatpush1.bf16.msra.mxu0 %v1500
        %2280 = vmatprep.subr.bf16.mxu0 %v1505
        %2281 = vmatpush1.bf16.msra.mxu0 %v1504
        %2282 = vmatprep.subr.bf16.mxu0 %v1509
        %2283 = vmatpush1.bf16.msra.mxu0 %v1508
        %2284 = vmatprep.subr.bf16.mxu0 %v1513
        %2285 = vmatpush1.bf16.msra.mxu0 %v1512
        %2286 = vmatprep.mubr.bf16.mxu0 %v619
        %2287 = vmatmul.mubr.bf16.gmra.mrb[0].mxu0 %v618
        %v2288 = vpop.f32.mrb[0].mxu0
        %v2289 = vadd.f32 0.0, %v2288
        %v2290 = vpop.f32.mrb[0].mxu0
        %v2291 = vadd.f32 0.0, %v2290
        %v2292 = vpop.f32.mrb[0].mxu0
        %v2293 = vadd.f32 0.0, %v2292
        %v2294 = vpop.f32.mrb[0].mxu0
        %v2295 = vadd.f32 0.0, %v2294
        %2296 = vmatprep.mubr.bf16.mxu0 %v627
        %2297 = vmatmul.mubr.bf16.gmra.mrb[0].mxu0 %v626
        %v2298 = vpop.f32.mrb[0].mxu0
        %v2299 = vadd.f32 0.0, %v2298
        %v2300 = vpop.f32.mrb[0].mxu0
        %v2301 = vadd.f32 0.0, %v2300
        %v2302 = vpop.f32.mrb[0].mxu0
        %v2303 = vadd.f32 0.0, %v2302
        %v2304 = vpop.f32.mrb[0].mxu0
        %v2305 = vadd.f32 0.0, %v2304
        %2306 = vmatprep.mubr.bf16.mxu0 %v635
        %2307 = vmatmul.mubr.bf16.gmra.mrb[0].mxu0 %v634
        %v2308 = vpop.f32.mrb[0].mxu0
        %v2309 = vadd.f32 0.0, %v2308
        %v2310 = vpop.f32.mrb[0].mxu0
        %v2311 = vadd.f32 0.0, %v2310
        %v2312 = vpop.f32.mrb[0].mxu0
        %v2313 = vadd.f32 0.0, %v2312
        %v2314 = vpop.f32.mrb[0].mxu0
        %v2315 = vadd.f32 0.0, %v2314
        %2316 = vmatprep.mubr.bf16.mxu0 %v643
        %2317 = vmatmul.mubr.bf16.gmra.mrb[0].mxu0 %v642
        %v2318 = vpop.f32.mrb[0].mxu0
        %v2319 = vadd.f32 0.0, %v2318
        %v2320 = vpop.f32.mrb[0].mxu0
        %v2321 = vadd.f32 0.0, %v2320
        %v2322 = vpop.f32.mrb[0].mxu0
        %v2323 = vadd.f32 0.0, %v2322
        %v2324 = vpop.f32.mrb[0].mxu0
        %v2325 = vadd.f32 0.0, %v2324
        %2326 = vdwg.mxu0
        %2327 = vmatprep.subr.bf16.mxu0 %v1517
        %2328 = vmatpush1.bf16.msra.mxu0 %v1516
        %2329 = vmatprep.subr.bf16.mxu0 %v1521
        %2330 = vmatpush1.bf16.msra.mxu0 %v1520
        %2331 = vmatprep.subr.bf16.mxu0 %v1525
        %2332 = vmatpush1.bf16.msra.mxu0 %v1524
        %2333 = vmatprep.subr.bf16.mxu0 %v1529
        %2334 = vmatpush1.bf16.msra.mxu0 %v1528
        %2335 = vmatprep.subr.bf16.mxu0 %v1533
        %2336 = vmatpush1.bf16.msra.mxu0 %v1532
        %2337 = vmatprep.subr.bf16.mxu0 %v1537
        %2338 = vmatpush1.bf16.msra.mxu0 %v1536
        %2339 = vmatprep.subr.bf16.mxu0 %v1541
        %2340 = vmatpush1.bf16.msra.mxu0 %v1540
        %2341 = vmatprep.subr.bf16.mxu0 %v1545
        %2342 = vmatpush1.bf16.msra.mxu0 %v1544
        %2343 = vmatprep.subr.bf16.mxu0 %v1549
        %2344 = vmatpush1.bf16.msra.mxu0 %v1548
        %2345 = vmatprep.subr.bf16.mxu0 %v1553
        %2346 = vmatpush1.bf16.msra.mxu0 %v1552
        %2347 = vmatprep.subr.bf16.mxu0 %v1557
        %2348 = vmatpush1.bf16.msra.mxu0 %v1556
        %2349 = vmatprep.subr.bf16.mxu0 %v1561
        %2350 = vmatpush1.bf16.msra.mxu0 %v1560
        %2351 = vmatprep.subr.bf16.mxu0 %v1565
        %2352 = vmatpush1.bf16.msra.mxu0 %v1564
        %2353 = vmatprep.subr.bf16.mxu0 %v1569
        %2354 = vmatpush1.bf16.msra.mxu0 %v1568
        %2355 = vmatprep.subr.bf16.mxu0 %v1573
        %2356 = vmatpush1.bf16.msra.mxu0 %v1572
        %2357 = vmatprep.subr.bf16.mxu0 %v1577
        %2358 = vmatpush1.bf16.msra.mxu0 %v1576
        %2359 = vmatprep.mubr.bf16.mxu0 %v621
        %2360 = vmatmul.mubr.bf16.gmra.mrb[0].mxu0 %v620
        %v2361 = vpop.f32.mrb[0].mxu0
        %v2362 = vadd.f32 %v2289, %v2361
        %v2363 = vpop.f32.mrb[0].mxu0
        %v2364 = vadd.f32 %v2291, %v2363
        %v2365 = vpop.f32.mrb[0].mxu0
        %v2366 = vadd.f32 %v2293, %v2365
        %v2367 = vpop.f32.mrb[0].mxu0
        %v2368 = vadd.f32 %v2295, %v2367
        %2369 = vmatprep.mubr.bf16.mxu0 %v629
        %2370 = vmatmul.mubr.bf16.gmra.mrb[0].mxu0 %v628
        %v2371 = vpop.f32.mrb[0].mxu0
        %v2372 = vadd.f32 %v2299, %v2371
        %v2373 = vpop.f32.mrb[0].mxu0
        %v2374 = vadd.f32 %v2301, %v2373
        %v2375 = vpop.f32.mrb[0].mxu0
        %v2376 = vadd.f32 %v2303, %v2375
        %v2377 = vpop.f32.mrb[0].mxu0
        %v2378 = vadd.f32 %v2305, %v2377
        %2379 = vmatprep.mubr.bf16.mxu0 %v637
        %2380 = vmatmul.mubr.bf16.gmra.mrb[0].mxu0 %v636
        %v2381 = vpop.f32.mrb[0].mxu0
        %v2382 = vadd.f32 %v2309, %v2381
        %v2383 = vpop.f32.mrb[0].mxu0
        %v2384 = vadd.f32 %v2311, %v2383
        %v2385 = vpop.f32.mrb[0].mxu0
        %v2386 = vadd.f32 %v2313, %v2385
        %v2387 = vpop.f32.mrb[0].mxu0
        %v2388 = vadd.f32 %v2315, %v2387
        %2389 = vmatprep.mubr.bf16.mxu0 %v645
        %2390 = vmatmul.mubr.bf16.gmra.mrb[0].mxu0 %v644
        %v2391 = vpop.f32.mrb[0].mxu0
        %v2392 = vadd.f32 %v2319, %v2391
        %v2393 = vpop.f32.mrb[0].mxu0
        %v2394 = vadd.f32 %v2321, %v2393
        %v2395 = vpop.f32.mrb[0].mxu0
        %v2396 = vadd.f32 %v2323, %v2395
        %v2397 = vpop.f32.mrb[0].mxu0
        %v2398 = vadd.f32 %v2325, %v2397
        %2399 = vdwg.mxu0
        %2400 = vmatprep.subr.bf16.mxu0 %v1581
        %2401 = vmatpush1.bf16.msra.mxu0 %v1580
        %2402 = vmatprep.subr.bf16.mxu0 %v1585
        %2403 = vmatpush1.bf16.msra.mxu0 %v1584
        %2404 = vmatprep.subr.bf16.mxu0 %v1589
        %2405 = vmatpush1.bf16.msra.mxu0 %v1588
        %2406 = vmatprep.subr.bf16.mxu0 %v1593
        %2407 = vmatpush1.bf16.msra.mxu0 %v1592
        %2408 = vmatprep.subr.bf16.mxu0 %v1597
        %2409 = vmatpush1.bf16.msra.mxu0 %v1596
        %2410 = vmatprep.subr.bf16.mxu0 %v1601
        %2411 = vmatpush1.bf16.msra.mxu0 %v1600
        %2412 = vmatprep.subr.bf16.mxu0 %v1605
        %2413 = vmatpush1.bf16.msra.mxu0 %v1604
        %2414 = vmatprep.subr.bf16.mxu0 %v1609
        %2415 = vmatpush1.bf16.msra.mxu0 %v1608
        %2416 = vmatprep.subr.bf16.mxu0 %v1613
        %2417 = vmatpush1.bf16.msra.mxu0 %v1612
        %2418 = vmatprep.subr.bf16.mxu0 %v1617
        %2419 = vmatpush1.bf16.msra.mxu0 %v1616
        %2420 = vmatprep.subr.bf16.mxu0 %v1621
        %2421 = vmatpush1.bf16.msra.mxu0 %v1620
        %2422 = vmatprep.subr.bf16.mxu0 %v1625
        %2423 = vmatpush1.bf16.msra.mxu0 %v1624
        %2424 = vmatprep.subr.bf16.mxu0 %v1629
        %2425 = vmatpush1.bf16.msra.mxu0 %v1628
        %2426 = vmatprep.subr.bf16.mxu0 %v1633
        %2427 = vmatpush1.bf16.msra.mxu0 %v1632
        %2428 = vmatprep.subr.bf16.mxu0 %v1637
        %2429 = vmatpush1.bf16.msra.mxu0 %v1636
        %2430 = vmatprep.subr.bf16.mxu0 %v1641
        %2431 = vmatpush1.bf16.msra.mxu0 %v1640
        %2432 = vmatprep.mubr.bf16.mxu0 %v623
        %2433 = vmatmul.mubr.bf16.gmra.mrb[0].mxu0 %v622
        %v2434 = vpop.f32.mrb[0].mxu0
        %v2435 = vadd.f32 %v2362, %v2434
        %v2436 = vpop.f32.mrb[0].mxu0
        %v2437 = vadd.f32 %v2364, %v2436
        %v2438 = vpop.f32.mrb[0].mxu0
        %v2439 = vadd.f32 %v2366, %v2438
        %v2440 = vpop.f32.mrb[0].mxu0
        %v2441 = vadd.f32 %v2368, %v2440
        %2442 = vmatprep.mubr.bf16.mxu0 %v631
        %2443 = vmatmul.mubr.bf16.gmra.mrb[0].mxu0 %v630
        %v2444 = vpop.f32.mrb[0].mxu0
        %v2445 = vadd.f32 %v2372, %v2444
        %v2446 = vpop.f32.mrb[0].mxu0
        %v2447 = vadd.f32 %v2374, %v2446
        %v2448 = vpop.f32.mrb[0].mxu0
        %v2449 = vadd.f32 %v2376, %v2448
        %v2450 = vpop.f32.mrb[0].mxu0
        %v2451 = vadd.f32 %v2378, %v2450
        %2452 = vmatprep.mubr.bf16.mxu0 %v639
        %2453 = vmatmul.mubr.bf16.gmra.mrb[0].mxu0 %v638
        %v2454 = vpop.f32.mrb[0].mxu0
        %v2455 = vadd.f32 %v2382, %v2454
        %v2456 = vpop.f32.mrb[0].mxu0
        %v2457 = vadd.f32 %v2384, %v2456
        %v2458 = vpop.f32.mrb[0].mxu0
        %v2459 = vadd.f32 %v2386, %v2458
        %v2460 = vpop.f32.mrb[0].mxu0
        %v2461 = vadd.f32 %v2388, %v2460
        %2462 = vmatprep.mubr.bf16.mxu0 %v647
        %2463 = vmatmul.mubr.bf16.gmra.mrb[0].mxu0 %v646
        %v2464 = vpop.f32.mrb[0].mxu0
        %v2465 = vadd.f32 %v2392, %v2464
        %v2466 = vpop.f32.mrb[0].mxu0
        %v2467 = vadd.f32 %v2394, %v2466
        %v2468 = vpop.f32.mrb[0].mxu0
        %v2469 = vadd.f32 %v2396, %v2468
        %v2470 = vpop.f32.mrb[0].mxu0
        %v2471 = vadd.f32 %v2398, %v2470
        %2472 = vdwg.mxu0
        %2473 = vmatprep.subr.bf16.mxu0 %v1645
        %2474 = vmatpush1.bf16.msra.mxu0 %v1644
        %2475 = vmatprep.subr.bf16.mxu0 %v1649
        %2476 = vmatpush1.bf16.msra.mxu0 %v1648
        %2477 = vmatprep.subr.bf16.mxu0 %v1653
        %2478 = vmatpush1.bf16.msra.mxu0 %v1652
        %2479 = vmatprep.subr.bf16.mxu0 %v1657
        %2480 = vmatpush1.bf16.msra.mxu0 %v1656
        %2481 = vmatprep.subr.bf16.mxu0 %v1661
        %2482 = vmatpush1.bf16.msra.mxu0 %v1660
        %2483 = vmatprep.subr.bf16.mxu0 %v1665
        %2484 = vmatpush1.bf16.msra.mxu0 %v1664
        %2485 = vmatprep.subr.bf16.mxu0 %v1669
        %2486 = vmatpush1.bf16.msra.mxu0 %v1668
        %2487 = vmatprep.subr.bf16.mxu0 %v1673
        %2488 = vmatpush1.bf16.msra.mxu0 %v1672
        %2489 = vmatprep.subr.bf16.mxu0 %v1677
        %2490 = vmatpush1.bf16.msra.mxu0 %v1676
        %2491 = vmatprep.subr.bf16.mxu0 %v1681
        %2492 = vmatpush1.bf16.msra.mxu0 %v1680
        %2493 = vmatprep.subr.bf16.mxu0 %v1685
        %2494 = vmatpush1.bf16.msra.mxu0 %v1684
        %2495 = vmatprep.subr.bf16.mxu0 %v1689
        %2496 = vmatpush1.bf16.msra.mxu0 %v1688
        %2497 = vmatprep.subr.bf16.mxu0 %v1693
        %2498 = vmatpush1.bf16.msra.mxu0 %v1692
        %2499 = vmatprep.subr.bf16.mxu0 %v1697
        %2500 = vmatpush1.bf16.msra.mxu0 %v1696
        %2501 = vmatprep.subr.bf16.mxu0 %v1701
        %2502 = vmatpush1.bf16.msra.mxu0 %v1700
        %2503 = vmatprep.subr.bf16.mxu0 %v1705
        %2504 = vmatpush1.bf16.msra.mxu0 %v1704
        %2505 = vmatprep.mubr.bf16.mxu0 %v625
        %2506 = vmatmul.mubr.bf16.gmra.mrb[0].mxu0 %v624
        %v2507 = vpop.f32.mrb[0].mxu0
        %v2508 = vadd.f32 %v2435, %v2507
        %v2509 = vpop.f32.mrb[0].mxu0
        %v2510 = vadd.f32 %v2437, %v2509
        %v2511 = vpop.f32.mrb[0].mxu0
        %v2512 = vadd.f32 %v2439, %v2511
        %v2513 = vpop.f32.mrb[0].mxu0
        %v2514 = vadd.f32 %v2441, %v2513
        %2515 = vmatprep.mubr.bf16.mxu0 %v633
        %2516 = vmatmul.mubr.bf16.gmra.mrb[0].mxu0 %v632
        %v2517 = vpop.f32.mrb[0].mxu0
        %v2518 = vadd.f32 %v2445, %v2517
        %v2519 = vpop.f32.mrb[0].mxu0
        %v2520 = vadd.f32 %v2447, %v2519
        %v2521 = vpop.f32.mrb[0].mxu0
        %v2522 = vadd.f32 %v2449, %v2521
        %v2523 = vpop.f32.mrb[0].mxu0
        %v2524 = vadd.f32 %v2451, %v2523
        %2525 = vmatprep.mubr.bf16.mxu0 %v641
        %2526 = vmatmul.mubr.bf16.gmra.mrb[0].mxu0 %v640
        %v2527 = vpop.f32.mrb[0].mxu0
        %v2528 = vadd.f32 %v2455, %v2527
        %v2529 = vpop.f32.mrb[0].mxu0
        %v2530 = vadd.f32 %v2457, %v2529
        %v2531 = vpop.f32.mrb[0].mxu0
        %v2532 = vadd.f32 %v2459, %v2531
        %v2533 = vpop.f32.mrb[0].mxu0
        %v2534 = vadd.f32 %v2461, %v2533
        %2535 = vmatprep.mubr.bf16.mxu0 %v649
        %2536 = vmatmul.mubr.bf16.gmra.mrb[0].mxu0 %v648
        %v2537 = vpop.f32.mrb[0].mxu0
        %v2538 = vadd.f32 %v2465, %v2537
        %v2539 = vpop.f32.mrb[0].mxu0
        %v2540 = vadd.f32 %v2467, %v2539
        %v2541 = vpop.f32.mrb[0].mxu0
        %v2542 = vadd.f32 %v2469, %v2541
        %v2543 = vpop.f32.mrb[0].mxu0
        %v2544 = vadd.f32 %v2471, %v2543
        %2545 = vdwg.mxu0
        %v2546 = vld [vmem:[%s2] sm:$0xf]
        %v2548 = vlaneseq
        %v2549 = vshrl.u32 %v2548, 7
        %v2550 = vsub.s32 0, %v2549
        %v2551 = vrot.slane %v2546, %v2550
        %v2552 = vlaneseq
        %v2553 = vshrl.u32 %v2552, 7
        %v2554 = vsub.s32 1, %v2553
        %v2555 = vrot.slane %v2546, %v2554
        %v2556 = vlaneseq
        %v2557 = vshrl.u32 %v2556, 7
        %v2558 = vsub.s32 2, %v2557
        %v2559 = vrot.slane %v2546, %v2558
        %v2560 = vlaneseq
        %v2561 = vshrl.u32 %v2560, 7
        %v2562 = vsub.s32 3, %v2561
        %v2563 = vrot.slane %v2546, %v2562
        %v2568 = vmul.f32 %v2216, %v2551
        %v2569 = vmul.f32 %v2218, %v2555
        %v2570 = vmul.f32 %v2508, %v2559
        %v2571 = vmul.f32 %v2510, %v2563
        %v2572 = vmul.f32 %v2220, %v2551
        %v2573 = vmul.f32 %v2222, %v2555
        %v2574 = vmul.f32 %v2512, %v2559
        %v2575 = vmul.f32 %v2514, %v2563
        %v2576 = vmul.f32 %v2226, %v2551
        %v2577 = vmul.f32 %v2228, %v2555
        %v2578 = vmul.f32 %v2518, %v2559
        %v2579 = vmul.f32 %v2520, %v2563
        %v2580 = vmul.f32 %v2230, %v2551
        %v2581 = vmul.f32 %v2232, %v2555
        %v2582 = vmul.f32 %v2522, %v2559
        %v2583 = vmul.f32 %v2524, %v2563
        %v2584 = vmul.f32 %v2236, %v2551
        %v2585 = vmul.f32 %v2238, %v2555
        %v2586 = vmul.f32 %v2528, %v2559
        %v2587 = vmul.f32 %v2530, %v2563
        %v2588 = vmul.f32 %v2240, %v2551
        %v2589 = vmul.f32 %v2242, %v2555
        %v2590 = vmul.f32 %v2532, %v2559
        %v2591 = vmul.f32 %v2534, %v2563
        %v2592 = vmul.f32 %v2246, %v2551
        %v2593 = vmul.f32 %v2248, %v2555
        %v2594 = vmul.f32 %v2538, %v2559
        %v2595 = vmul.f32 %v2540, %v2563
        %v2596 = vmul.f32 %v2250, %v2551
        %v2597 = vmul.f32 %v2252, %v2555
        %v2598 = vmul.f32 %v2542, %v2559
        %v2599 = vmul.f32 %v2544, %v2563
        %v2600 = vld [vmem:[%s3] sm:$0xf]
        %v2602 = vlaneseq
        %v2603 = vshrl.u32 %v2602, 7
        %v2604 = vsub.s32 0, %v2603
        %v2605 = vrot.slane %v2600, %v2604
        %v2606 = vlaneseq
        %v2607 = vshrl.u32 %v2606, 7
        %v2608 = vsub.s32 1, %v2607
        %v2609 = vrot.slane %v2600, %v2608
        %v2610 = vlaneseq
        %v2611 = vshrl.u32 %v2610, 7
        %v2612 = vsub.s32 2, %v2611
        %v2613 = vrot.slane %v2600, %v2612
        %v2614 = vlaneseq
        %v2615 = vshrl.u32 %v2614, 7
        %v2616 = vsub.s32 3, %v2615
        %v2617 = vrot.slane %v2600, %v2616
        %v2622 = vadd.f32 %v2568, %v2605
        %v2623 = vadd.f32 %v2569, %v2609
        %v2624 = vadd.f32 %v2570, %v2613
        %v2625 = vadd.f32 %v2571, %v2617
        %v2626 = vadd.f32 %v2572, %v2605
        %v2627 = vadd.f32 %v2573, %v2609
        %v2628 = vadd.f32 %v2574, %v2613
        %v2629 = vadd.f32 %v2575, %v2617
        %v2630 = vadd.f32 %v2576, %v2605
        %v2631 = vadd.f32 %v2577, %v2609
        %v2632 = vadd.f32 %v2578, %v2613
        %v2633 = vadd.f32 %v2579, %v2617
        %v2634 = vadd.f32 %v2580, %v2605
        %v2635 = vadd.f32 %v2581, %v2609
        %v2636 = vadd.f32 %v2582, %v2613
        %v2637 = vadd.f32 %v2583, %v2617
        %v2638 = vadd.f32 %v2584, %v2605
        %v2639 = vadd.f32 %v2585, %v2609
        %v2640 = vadd.f32 %v2586, %v2613
        %v2641 = vadd.f32 %v2587, %v2617
        %v2642 = vadd.f32 %v2588, %v2605
        %v2643 = vadd.f32 %v2589, %v2609
        %v2644 = vadd.f32 %v2590, %v2613
        %v2645 = vadd.f32 %v2591, %v2617
        %v2646 = vadd.f32 %v2592, %v2605
        %v2647 = vadd.f32 %v2593, %v2609
        %v2648 = vadd.f32 %v2594, %v2613
        %v2649 = vadd.f32 %v2595, %v2617
        %v2650 = vadd.f32 %v2596, %v2605
        %v2651 = vadd.f32 %v2597, %v2609
        %v2652 = vadd.f32 %v2598, %v2613
        %v2653 = vadd.f32 %v2599, %v2617
        %v2654 = vmax.f32 %v2622, 0.0
        %v2655 = vmax.f32 %v2623, 0.0
        %v2656 = vmax.f32 %v2624, 0.0
        %v2657 = vmax.f32 %v2625, 0.0
        %v2658 = vmax.f32 %v2626, 0.0
        %v2659 = vmax.f32 %v2627, 0.0
        %v2660 = vmax.f32 %v2628, 0.0
        %v2661 = vmax.f32 %v2629, 0.0
        %v2662 = vmax.f32 %v2630, 0.0
        %v2663 = vmax.f32 %v2631, 0.0
        %v2664 = vmax.f32 %v2632, 0.0
        %v2665 = vmax.f32 %v2633, 0.0
        %v2666 = vmax.f32 %v2634, 0.0
        %v2667 = vmax.f32 %v2635, 0.0
        %v2668 = vmax.f32 %v2636, 0.0
        %v2669 = vmax.f32 %v2637, 0.0
        %v2670 = vmax.f32 %v2638, 0.0
        %v2671 = vmax.f32 %v2639, 0.0
        %v2672 = vmax.f32 %v2640, 0.0
        %v2673 = vmax.f32 %v2641, 0.0
        %v2674 = vmax.f32 %v2642, 0.0
        %v2675 = vmax.f32 %v2643, 0.0
        %v2676 = vmax.f32 %v2644, 0.0
        %v2677 = vmax.f32 %v2645, 0.0
        %v2678 = vmax.f32 %v2646, 0.0
        %v2679 = vmax.f32 %v2647, 0.0
        %v2680 = vmax.f32 %v2648, 0.0
        %v2681 = vmax.f32 %v2649, 0.0
        %v2682 = vmax.f32 %v2650, 0.0
        %v2683 = vmax.f32 %v2651, 0.0
        %v2684 = vmax.f32 %v2652, 0.0
        %v2685 = vmax.f32 %v2653, 0.0
        %v2686 = vpack.c.bf16 %v2658, %v2654
        %v2687 = vpack.c.bf16 %v2659, %v2655
        %v2688 = vpack.c.bf16 %v2660, %v2656
        %v2689 = vpack.c.bf16 %v2661, %v2657
        %v2690 = vpack.c.bf16 %v2666, %v2662
        %v2691 = vpack.c.bf16 %v2667, %v2663
        %v2692 = vpack.c.bf16 %v2668, %v2664
        %v2693 = vpack.c.bf16 %v2669, %v2665
        %v2694 = vpack.c.bf16 %v2674, %v2670
        %v2695 = vpack.c.bf16 %v2675, %v2671
        %v2696 = vpack.c.bf16 %v2676, %v2672
        %v2697 = vpack.c.bf16 %v2677, %v2673
        %v2698 = vpack.c.bf16 %v2682, %v2678
        %v2699 = vpack.c.bf16 %v2683, %v2679
        %v2700 = vpack.c.bf16 %v2684, %v2680
        %v2701 = vpack.c.bf16 %v2685, %v2681
        %v2718 = vunpack.c.l.b16 %v2686
        %v2719 = vunpack.c.l.b16 %v2687
        %v2720 = vunpack.c.l.b16 %v2688
        %v2721 = vunpack.c.l.b16 %v2689
        %v2722 = vunpack.c.h.b16 %v2686
        %v2723 = vunpack.c.h.b16 %v2687
        %v2724 = vunpack.c.h.b16 %v2688
        %v2725 = vunpack.c.h.b16 %v2689
        %v2726 = vunpack.c.l.b16 %v2690
        %v2727 = vunpack.c.l.b16 %v2691
        %v2728 = vunpack.c.l.b16 %v2692
        %v2729 = vunpack.c.l.b16 %v2693
        %v2730 = vunpack.c.h.b16 %v2690
        %v2731 = vunpack.c.h.b16 %v2691
        %v2732 = vunpack.c.h.b16 %v2692
        %v2733 = vunpack.c.h.b16 %v2693
        %v2734 = vunpack.c.l.b16 %v2694
        %v2735 = vunpack.c.l.b16 %v2695
        %v2736 = vunpack.c.l.b16 %v2696
        %v2737 = vunpack.c.l.b16 %v2697
        %v2738 = vunpack.c.h.b16 %v2694
        %v2739 = vunpack.c.h.b16 %v2695
        %v2740 = vunpack.c.h.b16 %v2696
        %v2741 = vunpack.c.h.b16 %v2697
        %v2742 = vunpack.c.l.b16 %v2698
        %v2743 = vunpack.c.l.b16 %v2699
        %v2744 = vunpack.c.l.b16 %v2700
        %v2745 = vunpack.c.l.b16 %v2701
        %v2746 = vunpack.c.h.b16 %v2698
        %v2747 = vunpack.c.h.b16 %v2699
        %v2748 = vunpack.c.h.b16 %v2700
        %v2749 = vunpack.c.h.b16 %v2701
        %v2750 = vpack.c.b16 %v2719, %v2718
        %v2751 = vpack.c.b16 %v2721, %v2720
        %v2752 = vpack.c.b16 %v2723, %v2722
        %v2753 = vpack.c.b16 %v2725, %v2724
        %v2754 = vpack.c.b16 %v2727, %v2726
        %v2755 = vpack.c.b16 %v2729, %v2728
        %v2756 = vpack.c.b16 %v2731, %v2730
        %v2757 = vpack.c.b16 %v2733, %v2732
        %v2758 = vpack.c.b16 %v2735, %v2734
        %v2759 = vpack.c.b16 %v2737, %v2736
        %v2760 = vpack.c.b16 %v2739, %v2738
        %v2761 = vpack.c.b16 %v2741, %v2740
        %v2762 = vpack.c.b16 %v2743, %v2742
        %v2763 = vpack.c.b16 %v2745, %v2744
        %v2764 = vpack.c.b16 %v2747, %v2746
        %v2765 = vpack.c.b16 %v2749, %v2748
        %2782 = vst [vmem:[%s231] sm:$0xff] %v2750
        %2783 = vst [vmem:[%s231 + $0x8] sm:$0xff] %v2751
        %2784 = vst [vmem:[%s231 + $0x10] sm:$0xff] %v2752
        %2785 = vst [vmem:[%s231 + $0x18] sm:$0xff] %v2753
        %2786 = vst [vmem:[%s231 + $0x20] sm:$0xff] %v2754
        %2787 = vst [vmem:[%s231 + $0x28] sm:$0xff] %v2755
        %2788 = vst [vmem:[%s231 + $0x30] sm:$0xff] %v2756
        %2789 = vst [vmem:[%s231 + $0x38] sm:$0xff] %v2757
        %2790 = vst [vmem:[%s231 + $0x40] sm:$0xff] %v2758
        %2791 = vst [vmem:[%s231 + $0x48] sm:$0xff] %v2759
        %2792 = vst [vmem:[%s231 + $0x50] sm:$0xff] %v2760
        %2793 = vst [vmem:[%s231 + $0x58] sm:$0xff] %v2761
        %2794 = vst [vmem:[%s231 + $0x60] sm:$0xff] %v2762
        %2795 = vst [vmem:[%s231 + $0x68] sm:$0xff] %v2763
        %2796 = vst [vmem:[%s231 + $0x70] sm:$0xff] %v2764
        %2797 = vst [vmem:[%s231 + $0x78] sm:$0xff] %v2765
        %s2798 = sand.u32 %s119, 1
        %s2799 = scalar_lea.sflag [#allocation4], %s2798
        %s2800 = sand.u32 %s119, 1
        %s2801 = smul.addr %s2800, 128
        %s2802 = scalar_lea.vmem [#allocation7], %s2801
        // Predicated region
        $region45: #{tpu_custom_call.1} parent=35 // pred_check
          %p2803 = pneg %p129
        $region46: #{tpu_custom_call.1} parent=35 // pred_check_branch
          %2805 = sbr.rel (%p2803) target = $region48
        $region47: #{tpu_custom_call.1} parent=35 // pred_region
          %s2806 = smul.u32 8, %s22
          %s2808 = ssub.s32 2048, 2048
          %2809 = vsyncadd %s2799, %s2808
          %s2810 = smul.addr %s2806, 4
          %s2811 = smul.addr %s2810, 64
          %s2812 = scalar_lea.hbm %s4, %s2811
          %s2813 = sshll.u32 %s2802, 4
          %s2814 = int_to_ptr.vmem [resolvable:$true] %s2813
          %2819 = dma.vmem_to_hbm [thread:$0]  %s2814, 2048, %s2812, %s2799, 256, 256, 16
        $region48: #{tpu_custom_call.1} parent=35 // pred_fallthru
          _
      $region36: #{tpu_custom_call.1} parent=5 // pred_fallthru
        _
      %p2820 = scmp.le.s32.totalorder 2, %s17
      // Predicated region
      $region49: #{tpu_custom_call.1} parent=5 // pred_check
        %p2821 = pneg %p2820
      $region50: #{tpu_custom_call.1} parent=5 // pred_check_branch
        %2823 = sbr.rel (%p2821) target = $region52
      $region51: #{tpu_custom_call.1} parent=5 // pred_region
        %s2824 = ssub.s32 %s17, 2
        // Predicated region
        $region53: #{tpu_custom_call.1} parent=51 // pred_check
          %p2825 = pneg %p135
        $region54: #{tpu_custom_call.1} parent=51 // pred_check_branch
          %2827 = sbr.rel (%p2825) target = $region56
        $region55: #{tpu_custom_call.1} parent=51 // pred_region
          %s2828 = sand.u32 %s120, 1
          %s2829 = scalar_lea.sflag [#allocation4], %s2828
          %s2830 = sand.u32 %s120, 1
          %s2831 = smul.addr %s2830, 128
          %s2832 = scalar_lea.vmem [#allocation7], %s2831
          %2833 = dma.done %s2829, 2048
        $region56: #{tpu_custom_call.1} parent=51 // pred_fallthru
          _
      $region52: #{tpu_custom_call.1} parent=5 // pred_fallthru
        _
    $region6: #{tpu_custom_call.1} parent=1 // loop_footer
      %s21 = sadd.s32 1, %s17
    $region7: #{tpu_custom_call.1} parent=1 // loop_footer_branch
      %16 = sbr.rel target = $region3
    $region8: #{tpu_custom_call.1} parent=1 // loop_exit
      _
    %2834 = vsyncpa [#allocation3], 1
    %s2835 = scalar_lea.sflag [#allocation3], 1
    %2836 = vsyncpa %s2835, 1
    %2837 = vsyncpa [#allocation6], 1
    %2838 = vsyncpa [#allocation4], 1
    %s2839 = scalar_lea.sflag [#allocation4], 1
    %2840 = vsyncpa %s2839, 1

</llo_original>
